<compile_context>
chip_gen: v5e
topology: v5e:2x2
jax: 0.10.0
libtpu: 0.0.40
codegen_flags: <defaults>
</compile_context>

<pallas_src>
import math

import jax
import jax.numpy as jnp
from jax.experimental import pallas as pl
from jax.experimental.pallas import tpu as pltpu


# ---------------------------------------------------------------------------
# Configuration (small shapes consistent with the module's forward: x = [B,S,H])
# ---------------------------------------------------------------------------
B = 2              # batch
S = 8              # sequence length
D = 32             # hidden_dim
KS = 7             # conv kernel size
P = KS // 2        # 'same' padding = 3
SP = S + 2 * P     # padded rows per batch = 14
DP = D + 2 * P     # padded cols = 38
ROWS_PAD = B * SP          # 28 (batch folded into sublanes)
ROWS_OUT = ROWS_PAD - 2 * P  # 22 valid conv-output rows of the fused slab

_SQRT_HALF = 0.7071067811865476


def _erf(z):
    # Abramowitz & Stegun 7.1.26 (max abs err ~1.5e-7). Uses only exp / mul /
    # add / select, which lower cleanly on the TPU VPU/EUP. Not bit-identical
    # to PyTorch's exact erf, but well inside the 1e-4 tolerance.
    a1, a2, a3, a4, a5 = (0.254829592, -0.284496736, 1.421413741,
                          -1.453152027, 1.061405429)
    p = 0.3275911
    az = jnp.abs(z)
    t = 1.0 / (1.0 + p * az)   # exact divide kept (see header note on approx)
    poly = ((((a5 * t + a4) * t + a3) * t + a2) * t + a1) * t
    e = 1.0 - poly * jnp.exp(-az * az)
    return jnp.where(z >= 0.0, e, -e)


def _gelu_exact(x):
    # PyTorch nn.GELU() default (erf-based), NOT the tanh approximation.
    return 0.5 * x * (1.0 + _erf(x * _SQRT_HALF))


# ---------------------------------------------------------------------------
# Kernel
# ---------------------------------------------------------------------------
def residual_module_kernel(x_ref, w_ref, b_ref, o_ref, xpad_ref):
    """x_ref   : (B*S, D)   input, VMEM (batch folded into sublanes).
       w_ref   : (KS*KS,)   conv weights, SMEM (scalar taps).
       b_ref   : (1,)       conv bias, SMEM.
       o_ref   : (B*S, D)   output, VMEM.
       xpad_ref: (B*SP, DP) zero-padded slab scratch, VMEM.
    """
    # --- Build the zero-padded slab in VMEM (padding folded into the kernel).
    xpad_ref[...] = jnp.zeros_like(xpad_ref)
    for bi in range(B):
        xpad_ref[pl.ds(bi * SP + P, S), pl.ds(P, D)] = x_ref[pl.ds(bi * S, S), :]

    xp = xpad_ref[...]                       # (28, 38), loaded once, vreg-resident

    # --- Conv2d(1->1, 7x7, padding=3) as 49 VPU FMAs over shifted windows.
    # Lane shifts hoisted: one lane-offset slab per j (7 total), inner loop
    # takes only sublane slices of that resident slab.
    acc = jnp.zeros((ROWS_OUT, D), dtype=jnp.float32)
    for j in range(KS):
        lane_j = xp[:, j:j + D]              # (28, 32): one lane shift per j
        for i in range(KS):
            acc = acc + w_ref[i * KS + j] * lane_j[i:i + ROWS_OUT, :]
    conv = acc + b_ref[0]

    # --- Keep only the rows belonging to real (per-batch) sequence positions.
    conv_valid = jnp.concatenate(
        [conv[bi * SP:bi * SP + S, :] for bi in range(B)], axis=0)  # (B*S, D)

    # --- GELU(conv(x)) + x ; dropout is identity (eval-mode semantics).
    o_ref[...] = _gelu_exact(conv_valid) + x_ref[...]


def residual_module(x, w, b):
    """x: (B, S, D) float32; w: (KS, KS) conv weight; b: () conv bias."""
    x2 = jnp.reshape(x, (B * S, D)).astype(jnp.float32)   # free reshape
    w_flat = jnp.reshape(w, (-1,)).astype(jnp.float32)    # (49,)
    b_arr = jnp.reshape(b, (1,)).astype(jnp.float32)      # (1,)

    out2 = pl.pallas_call(
        residual_module_kernel,
        out_shape=jax.ShapeDtypeStruct((B * S, D), jnp.float32),
        in_specs=[
            pl.BlockSpec(memory_space=pltpu.MemorySpace.VMEM),  # x (B*S, D)
            pl.BlockSpec(memory_space=pltpu.MemorySpace.SMEM),  # conv weights
            pl.BlockSpec(memory_space=pltpu.MemorySpace.SMEM),  # conv bias
        ],
        out_specs=pl.BlockSpec(memory_space=pltpu.MemorySpace.VMEM),
        scratch_shapes=[pltpu.VMEM((ROWS_PAD, DP), jnp.float32)],  # padded slab
    )(x2, w_flat, b_arr)
    return jnp.reshape(out2, (B, S, D))


# ---------------------------------------------------------------------------
# Pure-JAX reference (mirrors the PyTorch forward exactly, eval-mode dropout)
# ---------------------------------------------------------------------------
def reference(x, w, b):
    y = jax.lax.conv_general_dilated(
        x[:, None, :, :],               # (B, 1, S, D)  NCHW
        w[None, None, :, :],            # (1, 1, KS, KS) OIHW
        window_strides=(1, 1),
        padding=[(P, P), (P, P)],
        dimension_numbers=("NCHW", "OIHW", "NCHW"),
    ) + b
    y = y[:, 0]                         # squeeze channel
    return jax.nn.gelu(y, approximate=False) + x


# ---------------------------------------------------------------------------
if __name__ == "__main__":
    key = jax.random.PRNGKey(0)
    kx, kw, kb = jax.random.split(key, 3)

    x = jax.random.normal(kx, (B, S, D), dtype=jnp.float32)
    bound = 1.0 / math.sqrt(KS * KS)    # PyTorch Conv2d default init range
    w = jax.random.uniform(kw, (KS, KS), jnp.float32, -bound, bound)
    b = jax.random.uniform(kb, (), jnp.float32, -bound, bound)

    out = jax.block_until_ready(residual_module(x, w, b))
    ref = jax.block_until_ready(reference(x, w, b))

    assert out.shape == (B, S, D)
    max_err = float(jnp.max(jnp.abs(out - ref)))
    assert jnp.allclose(out, ref, atol=1e-4, rtol=1e-4), f"max abs err {max_err}"

    # TODO(synk): nn.Dropout(0.1) is identity here (eval-mode semantics);
    # training-mode stochastic masking (pltpu.prng_seed + prng_random_bits)
    # is not implemented.
    print("KERNEL_OK")
</pallas_src>

<mosaic_0001>
module attributes {stable_mosaic.version = 11 : i64} {
  func.func @residual_module_kernel(%arg0: memref<16x32xf32, #tpu.memory_space<vmem>>, %arg1: memref<49xf32, #tpu.memory_space<smem>>, %arg2: memref<1xf32, #tpu.memory_space<smem>>, %arg3: memref<16x32xf32, #tpu.memory_space<vmem>>, %arg4: memref<28x38xf32, #tpu.memory_space<vmem>>) attributes {dimension_semantics = [], scalar_prefetch = 0 : i64, scratch_operands = 1 : i64, tpu.core_type = #tpu.core_type<tc>} {
    %cst = arith.constant 0.000000e+00 : f32
    %0 = vector.broadcast %cst : f32 to vector<28x38xf32>
    %c0 = arith.constant 0 : index
    %c0_0 = arith.constant 0 : index
    %1 = vector.load %arg4[%c0, %c0_0] : memref<28x38xf32, #tpu.memory_space<vmem>>, vector<28x38xf32>
    tpu.vector_store %arg4[%c0, %c0_0], %0 {strides = array<i32>} : memref<28x38xf32, #tpu.memory_space<vmem>>, vector<28x38xf32>,
    %c0_1 = arith.constant 0 : index
    %c0_2 = arith.constant 0 : index
    %2 = vector.load %arg0[%c0_1, %c0_2] : memref<16x32xf32, #tpu.memory_space<vmem>>, vector<8x32xf32>
    %c3 = arith.constant 3 : index
    %c3_3 = arith.constant 3 : index
    %3 = vector.load %arg4[%c3, %c3_3] : memref<28x38xf32, #tpu.memory_space<vmem>>, vector<8x32xf32>
    tpu.vector_store %arg4[%c3, %c3_3], %2 {strides = array<i32>} : memref<28x38xf32, #tpu.memory_space<vmem>>, vector<8x32xf32>,
    %c8 = arith.constant 8 : index
    %c0_4 = arith.constant 0 : index
    %4 = vector.load %arg0[%c8, %c0_4] : memref<16x32xf32, #tpu.memory_space<vmem>>, vector<8x32xf32>
    %c17 = arith.constant 17 : index
    %c3_5 = arith.constant 3 : index
    %5 = vector.load %arg4[%c17, %c3_5] : memref<28x38xf32, #tpu.memory_space<vmem>>, vector<8x32xf32>
    tpu.vector_store %arg4[%c17, %c3_5], %4 {strides = array<i32>} : memref<28x38xf32, #tpu.memory_space<vmem>>, vector<8x32xf32>,
    %c0_6 = arith.constant 0 : index
    %c0_7 = arith.constant 0 : index
    %6 = vector.load %arg4[%c0_6, %c0_7] : memref<28x38xf32, #tpu.memory_space<vmem>>, vector<28x38xf32>
    %cst_8 = arith.constant 0.000000e+00 : f32
    %7 = vector.broadcast %cst_8 : f32 to vector<22x32xf32>
    %8 = vector.extract_strided_slice %6 {offsets = [0, 0], sizes = [28, 32], strides = [1, 1]} : vector<28x38xf32> to vector<28x32xf32>
    %c0_9 = arith.constant 0 : index
    %9 = memref.load %arg1[%c0_9] : memref<49xf32, #tpu.memory_space<smem>>
    %10 = vector.extract_strided_slice %8 {offsets = [0, 0], sizes = [22, 32], strides = [1, 1]} : vector<28x32xf32> to vector<22x32xf32>
    %11 = vector.broadcast %9 : f32 to vector<22x32xf32>
    %12 = arith.mulf %11, %10 : vector<22x32xf32>
    %13 = arith.addf %7, %12 : vector<22x32xf32>
    %c7 = arith.constant 7 : index
    %14 = memref.load %arg1[%c7] : memref<49xf32, #tpu.memory_space<smem>>
    %15 = vector.extract_strided_slice %8 {offsets = [1, 0], sizes = [22, 32], strides = [1, 1]} : vector<28x32xf32> to vector<22x32xf32>
    %16 = vector.broadcast %14 : f32 to vector<22x32xf32>
    %17 = arith.mulf %16, %15 : vector<22x32xf32>
    %18 = arith.addf %13, %17 : vector<22x32xf32>
    %c14 = arith.constant 14 : index
    %19 = memref.load %arg1[%c14] : memref<49xf32, #tpu.memory_space<smem>>
    %20 = vector.extract_strided_slice %8 {offsets = [2, 0], sizes = [22, 32], strides = [1, 1]} : vector<28x32xf32> to vector<22x32xf32>
    %21 = vector.broadcast %19 : f32 to vector<22x32xf32>
    %22 = arith.mulf %21, %20 : vector<22x32xf32>
    %23 = arith.addf %18, %22 : vector<22x32xf32>
    %c21 = arith.constant 21 : index
    %24 = memref.load %arg1[%c21] : memref<49xf32, #tpu.memory_space<smem>>
    %25 = vector.extract_strided_slice %8 {offsets = [3, 0], sizes = [22, 32], strides = [1, 1]} : vector<28x32xf32> to vector<22x32xf32>
    %26 = vector.broadcast %24 : f32 to vector<22x32xf32>
    %27 = arith.mulf %26, %25 : vector<22x32xf32>
    %28 = arith.addf %23, %27 : vector<22x32xf32>
    %c28 = arith.constant 28 : index
    %29 = memref.load %arg1[%c28] : memref<49xf32, #tpu.memory_space<smem>>
    %30 = vector.extract_strided_slice %8 {offsets = [4, 0], sizes = [22, 32], strides = [1, 1]} : vector<28x32xf32> to vector<22x32xf32>
    %31 = vector.broadcast %29 : f32 to vector<22x32xf32>
    %32 = arith.mulf %31, %30 : vector<22x32xf32>
    %33 = arith.addf %28, %32 : vector<22x32xf32>
    %c35 = arith.constant 35 : index
    %34 = memref.load %arg1[%c35] : memref<49xf32, #tpu.memory_space<smem>>
    %35 = vector.extract_strided_slice %8 {offsets = [5, 0], sizes = [22, 32], strides = [1, 1]} : vector<28x32xf32> to vector<22x32xf32>
    %36 = vector.broadcast %34 : f32 to vector<22x32xf32>
    %37 = arith.mulf %36, %35 : vector<22x32xf32>
    %38 = arith.addf %33, %37 : vector<22x32xf32>
    %c42 = arith.constant 42 : index
    %39 = memref.load %arg1[%c42] : memref<49xf32, #tpu.memory_space<smem>>
    %40 = vector.extract_strided_slice %8 {offsets = [6, 0], sizes = [22, 32], strides = [1, 1]} : vector<28x32xf32> to vector<22x32xf32>
    %41 = vector.broadcast %39 : f32 to vector<22x32xf32>
    %42 = arith.mulf %41, %40 : vector<22x32xf32>
    %43 = arith.addf %38, %42 : vector<22x32xf32>
    %44 = vector.extract_strided_slice %6 {offsets = [0, 1], sizes = [28, 32], strides = [1, 1]} : vector<28x38xf32> to vector<28x32xf32>
    %c1 = arith.constant 1 : index
    %45 = memref.load %arg1[%c1] : memref<49xf32, #tpu.memory_space<smem>>
    %46 = vector.extract_strided_slice %44 {offsets = [0, 0], sizes = [22, 32], strides = [1, 1]} : vector<28x32xf32> to vector<22x32xf32>
    %47 = vector.broadcast %45 : f32 to vector<22x32xf32>
    %48 = arith.mulf %47, %46 : vector<22x32xf32>
    %49 = arith.addf %43, %48 : vector<22x32xf32>
    %c8_10 = arith.constant 8 : index
    %50 = memref.load %arg1[%c8_10] : memref<49xf32, #tpu.memory_space<smem>>
    %51 = vector.extract_strided_slice %44 {offsets = [1, 0], sizes = [22, 32], strides = [1, 1]} : vector<28x32xf32> to vector<22x32xf32>
    %52 = vector.broadcast %50 : f32 to vector<22x32xf32>
    %53 = arith.mulf %52, %51 : vector<22x32xf32>
    %54 = arith.addf %49, %53 : vector<22x32xf32>
    %c15 = arith.constant 15 : index
    %55 = memref.load %arg1[%c15] : memref<49xf32, #tpu.memory_space<smem>>
    %56 = vector.extract_strided_slice %44 {offsets = [2, 0], sizes = [22, 32], strides = [1, 1]} : vector<28x32xf32> to vector<22x32xf32>
    %57 = vector.broadcast %55 : f32 to vector<22x32xf32>
    %58 = arith.mulf %57, %56 : vector<22x32xf32>
    %59 = arith.addf %54, %58 : vector<22x32xf32>
    %c22 = arith.constant 22 : index
    %60 = memref.load %arg1[%c22] : memref<49xf32, #tpu.memory_space<smem>>
    %61 = vector.extract_strided_slice %44 {offsets = [3, 0], sizes = [22, 32], strides = [1, 1]} : vector<28x32xf32> to vector<22x32xf32>
    %62 = vector.broadcast %60 : f32 to vector<22x32xf32>
    %63 = arith.mulf %62, %61 : vector<22x32xf32>
    %64 = arith.addf %59, %63 : vector<22x32xf32>
    %c29 = arith.constant 29 : index
    %65 = memref.load %arg1[%c29] : memref<49xf32, #tpu.memory_space<smem>>
    %66 = vector.extract_strided_slice %44 {offsets = [4, 0], sizes = [22, 32], strides = [1, 1]} : vector<28x32xf32> to vector<22x32xf32>
    %67 = vector.broadcast %65 : f32 to vector<22x32xf32>
    %68 = arith.mulf %67, %66 : vector<22x32xf32>
    %69 = arith.addf %64, %68 : vector<22x32xf32>
    %c36 = arith.constant 36 : index
    %70 = memref.load %arg1[%c36] : memref<49xf32, #tpu.memory_space<smem>>
    %71 = vector.extract_strided_slice %44 {offsets = [5, 0], sizes = [22, 32], strides = [1, 1]} : vector<28x32xf32> to vector<22x32xf32>
    %72 = vector.broadcast %70 : f32 to vector<22x32xf32>
    %73 = arith.mulf %72, %71 : vector<22x32xf32>
    %74 = arith.addf %69, %73 : vector<22x32xf32>
    %c43 = arith.constant 43 : index
    %75 = memref.load %arg1[%c43] : memref<49xf32, #tpu.memory_space<smem>>
    %76 = vector.extract_strided_slice %44 {offsets = [6, 0], sizes = [22, 32], strides = [1, 1]} : vector<28x32xf32> to vector<22x32xf32>
    %77 = vector.broadcast %75 : f32 to vector<22x32xf32>
    %78 = arith.mulf %77, %76 : vector<22x32xf32>
    %79 = arith.addf %74, %78 : vector<22x32xf32>
    %80 = vector.extract_strided_slice %6 {offsets = [0, 2], sizes = [28, 32], strides = [1, 1]} : vector<28x38xf32> to vector<28x32xf32>
    %c2 = arith.constant 2 : index
    %81 = memref.load %arg1[%c2] : memref<49xf32, #tpu.memory_space<smem>>
    %82 = vector.extract_strided_slice %80 {offsets = [0, 0], sizes = [22, 32], strides = [1, 1]} : vector<28x32xf32> to vector<22x32xf32>
    %83 = vector.broadcast %81 : f32 to vector<22x32xf32>
    %84 = arith.mulf %83, %82 : vector<22x32xf32>
    %85 = arith.addf %79, %84 : vector<22x32xf32>
    %c9 = arith.constant 9 : index
    %86 = memref.load %arg1[%c9] : memref<49xf32, #tpu.memory_space<smem>>
    %87 = vector.extract_strided_slice %80 {offsets = [1, 0], sizes = [22, 32], strides = [1, 1]} : vector<28x32xf32> to vector<22x32xf32>
    %88 = vector.broadcast %86 : f32 to vector<22x32xf32>
    %89 = arith.mulf %88, %87 : vector<22x32xf32>
    %90 = arith.addf %85, %89 : vector<22x32xf32>
    %c16 = arith.constant 16 : index
    %91 = memref.load %arg1[%c16] : memref<49xf32, #tpu.memory_space<smem>>
    %92 = vector.extract_strided_slice %80 {offsets = [2, 0], sizes = [22, 32], strides = [1, 1]} : vector<28x32xf32> to vector<22x32xf32>
    %93 = vector.broadcast %91 : f32 to vector<22x32xf32>
    %94 = arith.mulf %93, %92 : vector<22x32xf32>
    %95 = arith.addf %90, %94 : vector<22x32xf32>
    %c23 = arith.constant 23 : index
    %96 = memref.load %arg1[%c23] : memref<49xf32, #tpu.memory_space<smem>>
    %97 = vector.extract_strided_slice %80 {offsets = [3, 0], sizes = [22, 32], strides = [1, 1]} : vector<28x32xf32> to vector<22x32xf32>
    %98 = vector.broadcast %96 : f32 to vector<22x32xf32>
    %99 = arith.mulf %98, %97 : vector<22x32xf32>
    %100 = arith.addf %95, %99 : vector<22x32xf32>
    %c30 = arith.constant 30 : index
    %101 = memref.load %arg1[%c30] : memref<49xf32, #tpu.memory_space<smem>>
    %102 = vector.extract_strided_slice %80 {offsets = [4, 0], sizes = [22, 32], strides = [1, 1]} : vector<28x32xf32> to vector<22x32xf32>
    %103 = vector.broadcast %101 : f32 to vector<22x32xf32>
    %104 = arith.mulf %103, %102 : vector<22x32xf32>
    %105 = arith.addf %100, %104 : vector<22x32xf32>
    %c37 = arith.constant 37 : index
    %106 = memref.load %arg1[%c37] : memref<49xf32, #tpu.memory_space<smem>>
    %107 = vector.extract_strided_slice %80 {offsets = [5, 0], sizes = [22, 32], strides = [1, 1]} : vector<28x32xf32> to vector<22x32xf32>
    %108 = vector.broadcast %106 : f32 to vector<22x32xf32>
    %109 = arith.mulf %108, %107 : vector<22x32xf32>
    %110 = arith.addf %105, %109 : vector<22x32xf32>
    %c44 = arith.constant 44 : index
    %111 = memref.load %arg1[%c44] : memref<49xf32, #tpu.memory_space<smem>>
    %112 = vector.extract_strided_slice %80 {offsets = [6, 0], sizes = [22, 32], strides = [1, 1]} : vector<28x32xf32> to vector<22x32xf32>
    %113 = vector.broadcast %111 : f32 to vector<22x32xf32>
    %114 = arith.mulf %113, %112 : vector<22x32xf32>
    %115 = arith.addf %110, %114 : vector<22x32xf32>
    %116 = vector.extract_strided_slice %6 {offsets = [0, 3], sizes = [28, 32], strides = [1, 1]} : vector<28x38xf32> to vector<28x32xf32>
    %c3_11 = arith.constant 3 : index
    %117 = memref.load %arg1[%c3_11] : memref<49xf32, #tpu.memory_space<smem>>
    %118 = vector.extract_strided_slice %116 {offsets = [0, 0], sizes = [22, 32], strides = [1, 1]} : vector<28x32xf32> to vector<22x32xf32>
    %119 = vector.broadcast %117 : f32 to vector<22x32xf32>
    %120 = arith.mulf %119, %118 : vector<22x32xf32>
    %121 = arith.addf %115, %120 : vector<22x32xf32>
    %c10 = arith.constant 10 : index
    %122 = memref.load %arg1[%c10] : memref<49xf32, #tpu.memory_space<smem>>
    %123 = vector.extract_strided_slice %116 {offsets = [1, 0], sizes = [22, 32], strides = [1, 1]} : vector<28x32xf32> to vector<22x32xf32>
    %124 = vector.broadcast %122 : f32 to vector<22x32xf32>
    %125 = arith.mulf %124, %123 : vector<22x32xf32>
    %126 = arith.addf %121, %125 : vector<22x32xf32>
    %c17_12 = arith.constant 17 : index
    %127 = memref.load %arg1[%c17_12] : memref<49xf32, #tpu.memory_space<smem>>
    %128 = vector.extract_strided_slice %116 {offsets = [2, 0], sizes = [22, 32], strides = [1, 1]} : vector<28x32xf32> to vector<22x32xf32>
    %129 = vector.broadcast %127 : f32 to vector<22x32xf32>
    %130 = arith.mulf %129, %128 : vector<22x32xf32>
    %131 = arith.addf %126, %130 : vector<22x32xf32>
    %c24 = arith.constant 24 : index
    %132 = memref.load %arg1[%c24] : memref<49xf32, #tpu.memory_space<smem>>
    %133 = vector.extract_strided_slice %116 {offsets = [3, 0], sizes = [22, 32], strides = [1, 1]} : vector<28x32xf32> to vector<22x32xf32>
    %134 = vector.broadcast %132 : f32 to vector<22x32xf32>
    %135 = arith.mulf %134, %133 : vector<22x32xf32>
    %136 = arith.addf %131, %135 : vector<22x32xf32>
    %c31 = arith.constant 31 : index
    %137 = memref.load %arg1[%c31] : memref<49xf32, #tpu.memory_space<smem>>
    %138 = vector.extract_strided_slice %116 {offsets = [4, 0], sizes = [22, 32], strides = [1, 1]} : vector<28x32xf32> to vector<22x32xf32>
    %139 = vector.broadcast %137 : f32 to vector<22x32xf32>
    %140 = arith.mulf %139, %138 : vector<22x32xf32>
    %141 = arith.addf %136, %140 : vector<22x32xf32>
    %c38 = arith.constant 38 : index
    %142 = memref.load %arg1[%c38] : memref<49xf32, #tpu.memory_space<smem>>
    %143 = vector.extract_strided_slice %116 {offsets = [5, 0], sizes = [22, 32], strides = [1, 1]} : vector<28x32xf32> to vector<22x32xf32>
    %144 = vector.broadcast %142 : f32 to vector<22x32xf32>
    %145 = arith.mulf %144, %143 : vector<22x32xf32>
    %146 = arith.addf %141, %145 : vector<22x32xf32>
    %c45 = arith.constant 45 : index
    %147 = memref.load %arg1[%c45] : memref<49xf32, #tpu.memory_space<smem>>
    %148 = vector.extract_strided_slice %116 {offsets = [6, 0], sizes = [22, 32], strides = [1, 1]} : vector<28x32xf32> to vector<22x32xf32>
    %149 = vector.broadcast %147 : f32 to vector<22x32xf32>
    %150 = arith.mulf %149, %148 : vector<22x32xf32>
    %151 = arith.addf %146, %150 : vector<22x32xf32>
    %152 = vector.extract_strided_slice %6 {offsets = [0, 4], sizes = [28, 32], strides = [1, 1]} : vector<28x38xf32> to vector<28x32xf32>
    %c4 = arith.constant 4 : index
    %153 = memref.load %arg1[%c4] : memref<49xf32, #tpu.memory_space<smem>>
    %154 = vector.extract_strided_slice %152 {offsets = [0, 0], sizes = [22, 32], strides = [1, 1]} : vector<28x32xf32> to vector<22x32xf32>
    %155 = vector.broadcast %153 : f32 to vector<22x32xf32>
    %156 = arith.mulf %155, %154 : vector<22x32xf32>
    %157 = arith.addf %151, %156 : vector<22x32xf32>
    %c11 = arith.constant 11 : index
    %158 = memref.load %arg1[%c11] : memref<49xf32, #tpu.memory_space<smem>>
    %159 = vector.extract_strided_slice %152 {offsets = [1, 0], sizes = [22, 32], strides = [1, 1]} : vector<28x32xf32> to vector<22x32xf32>
    %160 = vector.broadcast %158 : f32 to vector<22x32xf32>
    %161 = arith.mulf %160, %159 : vector<22x32xf32>
    %162 = arith.addf %157, %161 : vector<22x32xf32>
    %c18 = arith.constant 18 : index
    %163 = memref.load %arg1[%c18] : memref<49xf32, #tpu.memory_space<smem>>
    %164 = vector.extract_strided_slice %152 {offsets = [2, 0], sizes = [22, 32], strides = [1, 1]} : vector<28x32xf32> to vector<22x32xf32>
    %165 = vector.broadcast %163 : f32 to vector<22x32xf32>
    %166 = arith.mulf %165, %164 : vector<22x32xf32>
    %167 = arith.addf %162, %166 : vector<22x32xf32>
    %c25 = arith.constant 25 : index
    %168 = memref.load %arg1[%c25] : memref<49xf32, #tpu.memory_space<smem>>
    %169 = vector.extract_strided_slice %152 {offsets = [3, 0], sizes = [22, 32], strides = [1, 1]} : vector<28x32xf32> to vector<22x32xf32>
    %170 = vector.broadcast %168 : f32 to vector<22x32xf32>
    %171 = arith.mulf %170, %169 : vector<22x32xf32>
    %172 = arith.addf %167, %171 : vector<22x32xf32>
    %c32 = arith.constant 32 : index
    %173 = memref.load %arg1[%c32] : memref<49xf32, #tpu.memory_space<smem>>
    %174 = vector.extract_strided_slice %152 {offsets = [4, 0], sizes = [22, 32], strides = [1, 1]} : vector<28x32xf32> to vector<22x32xf32>
    %175 = vector.broadcast %173 : f32 to vector<22x32xf32>
    %176 = arith.mulf %175, %174 : vector<22x32xf32>
    %177 = arith.addf %172, %176 : vector<22x32xf32>
    %c39 = arith.constant 39 : index
    %178 = memref.load %arg1[%c39] : memref<49xf32, #tpu.memory_space<smem>>
    %179 = vector.extract_strided_slice %152 {offsets = [5, 0], sizes = [22, 32], strides = [1, 1]} : vector<28x32xf32> to vector<22x32xf32>
    %180 = vector.broadcast %178 : f32 to vector<22x32xf32>
    %181 = arith.mulf %180, %179 : vector<22x32xf32>
    %182 = arith.addf %177, %181 : vector<22x32xf32>
    %c46 = arith.constant 46 : index
    %183 = memref.load %arg1[%c46] : memref<49xf32, #tpu.memory_space<smem>>
    %184 = vector.extract_strided_slice %152 {offsets = [6, 0], sizes = [22, 32], strides = [1, 1]} : vector<28x32xf32> to vector<22x32xf32>
    %185 = vector.broadcast %183 : f32 to vector<22x32xf32>
    %186 = arith.mulf %185, %184 : vector<22x32xf32>
    %187 = arith.addf %182, %186 : vector<22x32xf32>
    %188 = vector.extract_strided_slice %6 {offsets = [0, 5], sizes = [28, 32], strides = [1, 1]} : vector<28x38xf32> to vector<28x32xf32>
    %c5 = arith.constant 5 : index
    %189 = memref.load %arg1[%c5] : memref<49xf32, #tpu.memory_space<smem>>
    %190 = vector.extract_strided_slice %188 {offsets = [0, 0], sizes = [22, 32], strides = [1, 1]} : vector<28x32xf32> to vector<22x32xf32>
    %191 = vector.broadcast %189 : f32 to vector<22x32xf32>
    %192 = arith.mulf %191, %190 : vector<22x32xf32>
    %193 = arith.addf %187, %192 : vector<22x32xf32>
    %c12 = arith.constant 12 : index
    %194 = memref.load %arg1[%c12] : memref<49xf32, #tpu.memory_space<smem>>
    %195 = vector.extract_strided_slice %188 {offsets = [1, 0], sizes = [22, 32], strides = [1, 1]} : vector<28x32xf32> to vector<22x32xf32>
    %196 = vector.broadcast %194 : f32 to vector<22x32xf32>
    %197 = arith.mulf %196, %195 : vector<22x32xf32>
    %198 = arith.addf %193, %197 : vector<22x32xf32>
    %c19 = arith.constant 19 : index
    %199 = memref.load %arg1[%c19] : memref<49xf32, #tpu.memory_space<smem>>
    %200 = vector.extract_strided_slice %188 {offsets = [2, 0], sizes = [22, 32], strides = [1, 1]} : vector<28x32xf32> to vector<22x32xf32>
    %201 = vector.broadcast %199 : f32 to vector<22x32xf32>
    %202 = arith.mulf %201, %200 : vector<22x32xf32>
    %203 = arith.addf %198, %202 : vector<22x32xf32>
    %c26 = arith.constant 26 : index
    %204 = memref.load %arg1[%c26] : memref<49xf32, #tpu.memory_space<smem>>
    %205 = vector.extract_strided_slice %188 {offsets = [3, 0], sizes = [22, 32], strides = [1, 1]} : vector<28x32xf32> to vector<22x32xf32>
    %206 = vector.broadcast %204 : f32 to vector<22x32xf32>
    %207 = arith.mulf %206, %205 : vector<22x32xf32>
    %208 = arith.addf %203, %207 : vector<22x32xf32>
    %c33 = arith.constant 33 : index
    %209 = memref.load %arg1[%c33] : memref<49xf32, #tpu.memory_space<smem>>
    %210 = vector.extract_strided_slice %188 {offsets = [4, 0], sizes = [22, 32], strides = [1, 1]} : vector<28x32xf32> to vector<22x32xf32>
    %211 = vector.broadcast %209 : f32 to vector<22x32xf32>
    %212 = arith.mulf %211, %210 : vector<22x32xf32>
    %213 = arith.addf %208, %212 : vector<22x32xf32>
    %c40 = arith.constant 40 : index
    %214 = memref.load %arg1[%c40] : memref<49xf32, #tpu.memory_space<smem>>
    %215 = vector.extract_strided_slice %188 {offsets = [5, 0], sizes = [22, 32], strides = [1, 1]} : vector<28x32xf32> to vector<22x32xf32>
    %216 = vector.broadcast %214 : f32 to vector<22x32xf32>
    %217 = arith.mulf %216, %215 : vector<22x32xf32>
    %218 = arith.addf %213, %217 : vector<22x32xf32>
    %c47 = arith.constant 47 : index
    %219 = memref.load %arg1[%c47] : memref<49xf32, #tpu.memory_space<smem>>
    %220 = vector.extract_strided_slice %188 {offsets = [6, 0], sizes = [22, 32], strides = [1, 1]} : vector<28x32xf32> to vector<22x32xf32>
    %221 = vector.broadcast %219 : f32 to vector<22x32xf32>
    %222 = arith.mulf %221, %220 : vector<22x32xf32>
    %223 = arith.addf %218, %222 : vector<22x32xf32>
    %224 = vector.extract_strided_slice %6 {offsets = [0, 6], sizes = [28, 32], strides = [1, 1]} : vector<28x38xf32> to vector<28x32xf32>
    %c6 = arith.constant 6 : index
    %225 = memref.load %arg1[%c6] : memref<49xf32, #tpu.memory_space<smem>>
    %226 = vector.extract_strided_slice %224 {offsets = [0, 0], sizes = [22, 32], strides = [1, 1]} : vector<28x32xf32> to vector<22x32xf32>
    %227 = vector.broadcast %225 : f32 to vector<22x32xf32>
    %228 = arith.mulf %227, %226 : vector<22x32xf32>
    %229 = arith.addf %223, %228 : vector<22x32xf32>
    %c13 = arith.constant 13 : index
    %230 = memref.load %arg1[%c13] : memref<49xf32, #tpu.memory_space<smem>>
    %231 = vector.extract_strided_slice %224 {offsets = [1, 0], sizes = [22, 32], strides = [1, 1]} : vector<28x32xf32> to vector<22x32xf32>
    %232 = vector.broadcast %230 : f32 to vector<22x32xf32>
    %233 = arith.mulf %232, %231 : vector<22x32xf32>
    %234 = arith.addf %229, %233 : vector<22x32xf32>
    %c20 = arith.constant 20 : index
    %235 = memref.load %arg1[%c20] : memref<49xf32, #tpu.memory_space<smem>>
    %236 = vector.extract_strided_slice %224 {offsets = [2, 0], sizes = [22, 32], strides = [1, 1]} : vector<28x32xf32> to vector<22x32xf32>
    %237 = vector.broadcast %235 : f32 to vector<22x32xf32>
    %238 = arith.mulf %237, %236 : vector<22x32xf32>
    %239 = arith.addf %234, %238 : vector<22x32xf32>
    %c27 = arith.constant 27 : index
    %240 = memref.load %arg1[%c27] : memref<49xf32, #tpu.memory_space<smem>>
    %241 = vector.extract_strided_slice %224 {offsets = [3, 0], sizes = [22, 32], strides = [1, 1]} : vector<28x32xf32> to vector<22x32xf32>
    %242 = vector.broadcast %240 : f32 to vector<22x32xf32>
    %243 = arith.mulf %242, %241 : vector<22x32xf32>
    %244 = arith.addf %239, %243 : vector<22x32xf32>
    %c34 = arith.constant 34 : index
    %245 = memref.load %arg1[%c34] : memref<49xf32, #tpu.memory_space<smem>>
    %246 = vector.extract_strided_slice %224 {offsets = [4, 0], sizes = [22, 32], strides = [1, 1]} : vector<28x32xf32> to vector<22x32xf32>
    %247 = vector.broadcast %245 : f32 to vector<22x32xf32>
    %248 = arith.mulf %247, %246 : vector<22x32xf32>
    %249 = arith.addf %244, %248 : vector<22x32xf32>
    %c41 = arith.constant 41 : index
    %250 = memref.load %arg1[%c41] : memref<49xf32, #tpu.memory_space<smem>>
    %251 = vector.extract_strided_slice %224 {offsets = [5, 0], sizes = [22, 32], strides = [1, 1]} : vector<28x32xf32> to vector<22x32xf32>
    %252 = vector.broadcast %250 : f32 to vector<22x32xf32>
    %253 = arith.mulf %252, %251 : vector<22x32xf32>
    %254 = arith.addf %249, %253 : vector<22x32xf32>
    %c48 = arith.constant 48 : index
    %255 = memref.load %arg1[%c48] : memref<49xf32, #tpu.memory_space<smem>>
    %256 = vector.extract_strided_slice %224 {offsets = [6, 0], sizes = [22, 32], strides = [1, 1]} : vector<28x32xf32> to vector<22x32xf32>
    %257 = vector.broadcast %255 : f32 to vector<22x32xf32>
    %258 = arith.mulf %257, %256 : vector<22x32xf32>
    %259 = arith.addf %254, %258 : vector<22x32xf32>
    %c0_13 = arith.constant 0 : index
    %260 = memref.load %arg2[%c0_13] : memref<1xf32, #tpu.memory_space<smem>>
    %261 = vector.broadcast %260 : f32 to vector<22x32xf32>
    %262 = arith.addf %259, %261 : vector<22x32xf32>
    %263 = vector.extract_strided_slice %262 {offsets = [0, 0], sizes = [8, 32], strides = [1, 1]} : vector<22x32xf32> to vector<8x32xf32>
    %264 = vector.extract_strided_slice %262 {offsets = [14, 0], sizes = [8, 32], strides = [1, 1]} : vector<22x32xf32> to vector<8x32xf32>
    %265 = tpu.concatenate %263, %264 in 0 : vector<8x32xf32>, vector<8x32xf32> -> vector<16x32xf32>
    %cst_14 = arith.constant 5.000000e-01 : f32
    %266 = vector.broadcast %cst_14 : f32 to vector<16x32xf32>
    %267 = arith.mulf %266, %265 : vector<16x32xf32>
    %cst_15 = arith.constant 0.707106769 : f32
    %268 = vector.broadcast %cst_15 : f32 to vector<16x32xf32>
    %269 = arith.mulf %265, %268 : vector<16x32xf32>
    %270 = math.absf %269 : vector<16x32xf32>
    %cst_16 = arith.constant 0.327591091 : f32
    %271 = vector.broadcast %cst_16 : f32 to vector<16x32xf32>
    %272 = arith.mulf %271, %270 : vector<16x32xf32>
    %cst_17 = arith.constant 1.000000e+00 : f32
    %273 = vector.broadcast %cst_17 : f32 to vector<16x32xf32>
    %274 = arith.addf %273, %272 : vector<16x32xf32>
    %cst_18 = arith.constant 1.000000e+00 : f32
    %275 = vector.broadcast %cst_18 : f32 to vector<16x32xf32>
    %276 = arith.divf %275, %274 : vector<16x32xf32>
    %cst_19 = arith.constant 1.06140542 : f32
    %277 = vector.broadcast %cst_19 : f32 to vector<16x32xf32>
    %278 = arith.mulf %277, %276 : vector<16x32xf32>
    %cst_20 = arith.constant -1.45315206 : f32
    %279 = vector.broadcast %cst_20 : f32 to vector<16x32xf32>
    %280 = arith.addf %278, %279 : vector<16x32xf32>
    %281 = arith.mulf %280, %276 : vector<16x32xf32>
    %cst_21 = arith.constant 1.42141378 : f32
    %282 = vector.broadcast %cst_21 : f32 to vector<16x32xf32>
    %283 = arith.addf %281, %282 : vector<16x32xf32>
    %284 = arith.mulf %283, %276 : vector<16x32xf32>
    %cst_22 = arith.constant -0.284496725 : f32
    %285 = vector.broadcast %cst_22 : f32 to vector<16x32xf32>
    %286 = arith.addf %284, %285 : vector<16x32xf32>
    %287 = arith.mulf %286, %276 : vector<16x32xf32>
    %cst_23 = arith.constant 0.254829586 : f32
    %288 = vector.broadcast %cst_23 : f32 to vector<16x32xf32>
    %289 = arith.addf %287, %288 : vector<16x32xf32>
    %290 = arith.mulf %289, %276 : vector<16x32xf32>
    %cst_24 = arith.constant 0.000000e+00 : f32
    %291 = vector.broadcast %cst_24 : f32 to vector<16x32xf32>
    %292 = arith.subf %291, %270 : vector<16x32xf32>
    %293 = arith.mulf %292, %270 : vector<16x32xf32>
    %294 = math.exp %293 : vector<16x32xf32>
    %295 = arith.mulf %290, %294 : vector<16x32xf32>
    %cst_25 = arith.constant 1.000000e+00 : f32
    %296 = vector.broadcast %cst_25 : f32 to vector<16x32xf32>
    %297 = arith.subf %296, %295 : vector<16x32xf32>
    %cst_26 = arith.constant 0.000000e+00 : f32
    %298 = vector.broadcast %cst_26 : f32 to vector<16x32xf32>
    %299 = arith.cmpf oge, %269, %298 : vector<16x32xf32>
    %cst_27 = arith.constant 0.000000e+00 : f32
    %300 = vector.broadcast %cst_27 : f32 to vector<16x32xf32>
    %301 = arith.subf %300, %297 : vector<16x32xf32>
    %302 = arith.select %299, %297, %301 : vector<16x32xi1>, vector<16x32xf32>
    %cst_28 = arith.constant 1.000000e+00 : f32
    %303 = vector.broadcast %cst_28 : f32 to vector<16x32xf32>
    %304 = arith.addf %303, %302 : vector<16x32xf32>
    %305 = arith.mulf %267, %304 : vector<16x32xf32>
    %c0_29 = arith.constant 0 : index
    %c0_30 = arith.constant 0 : index
    %306 = vector.load %arg0[%c0_29, %c0_30] : memref<16x32xf32, #tpu.memory_space<vmem>>, vector<16x32xf32>
    %307 = arith.addf %305, %306 : vector<16x32xf32>
    %c0_31 = arith.constant 0 : index
    %c0_32 = arith.constant 0 : index
    %308 = vector.load %arg3[%c0_31, %c0_32] : memref<16x32xf32, #tpu.memory_space<vmem>>, vector<16x32xf32>
    tpu.vector_store %arg3[%c0_31, %c0_32], %307 {strides = array<i32>} : memref<16x32xf32, #tpu.memory_space<vmem>>, vector<16x32xf32>,
    return
  }
}

</mosaic_0001>

<llo_original>
// kernel: tpu_custom_call.1
$region0: #{tpu_custom_call.1}
  #allocation0 [shape = 'u32[]', space=smem, size = 0x4, offset = 0x4, fixed_abs, tag = 'smem constant byte address 0x4 - core index']
  #allocation1 [shape = 'u32[72,128]{1,0:T(1,128)}', space=vmem, size = 0x9000, scoped, tag = 'internal scratch']
  #allocation2 [shape = 'f32[28,38]{1,0:T(8,128)}', space=vmem, size = 0x4000, scoped, tag = 'scratch operand']
  #allocation3 [shape = 'f32[1]{0:T(128)S(6)}', space=smem, size = 0x200, scoped, tag = 'scoped memory for tpu_custom_call.1']
  %s0 = inlined_call_operand.hbm [shape: f32[16,32], index: 0, kind: input, shape index: {}]
  %s1 = inlined_call_operand.vmem [shape: f32[49], index: 1, kind: input, shape index: {}]
  %s2 = inlined_call_operand.<no memory space> [shape: f32[1], index: 2, kind: input, shape index: {}]
  %s3 = inlined_call_operand.hbm [shape: f32[16,32], index: 3, kind: output, shape index: {}]
  %s4 = sld [smem:[#allocation0]]
  $region30: #{tpu_custom_call.1} parent=0
    _
  %s6 = ssub.s32 1, %s4
  %s7 = scalar_select 0, %s6, %s4
  %8 = sst [smem:[#allocation3]] %s2
  $region1: #{tpu_custom_call.1} parent=0
    #allocation4 [shape = 'u8[8192]{0}', space=vmem, size = 0x2000, scoped, tag = 'input window, operand 0, single buffered']
    #allocation5 [shape = 's32[1]{0}', space=sflag, size = 0x4, scoped, tag = 'scoped memory for tpu_custom_call.1']
    #allocation6 [shape = 's32[1]{0}', space=sflag, size = 0x4, scoped, tag = 'scoped memory for tpu_custom_call.1']
    #allocation7 [shape = 's32[1]{0}', space=sflag, size = 0x4, scoped, tag = 'scoped memory for tpu_custom_call.1']
    #allocation8 [shape = 'u8[512]{0}', space=smem, size = 0x200, scoped, tag = 'input window, operand 1, single buffered']
    #allocation9 [shape = 'u8[8192]{0}', space=vmem, size = 0x2000, scoped, tag = 'output window, operand 0, single buffered']
    %9 = vsyncpa [#allocation5], 0
    %10 = vsyncpa [#allocation7], 0
    %11 = vsyncpa [#allocation6], 0
    // Predicated region
    $region2: #{tpu_custom_call.1} parent=1 // pred_check
      _
    $region3: #{tpu_custom_call.1} parent=1 // pred_check_branch
      %13 = sbr.rel (0) target = $region5
    $region4: #{tpu_custom_call.1} parent=1 // pred_region
      %15 = vsyncadd [#allocation5], 0
      %s16 = sshll.u32 %s0, 4
      %s17 = int_to_ptr.hbm [resolvable:$true] %s16
      %s18 = sshll.u32 [#allocation4], 4
      %s19 = int_to_ptr.vmem [resolvable:$true] %s18
      %24 = dma.hbm_to_vmem [thread:$0]  %s17, 256, %s19, [#allocation5], 128, 128, 8
    $region5: #{tpu_custom_call.1} parent=1 // pred_fallthru
      _
    // Predicated region
    $region6: #{tpu_custom_call.1} parent=1 // pred_check
      _
    $region7: #{tpu_custom_call.1} parent=1 // pred_check_branch
      %26 = sbr.rel (0) target = $region9
    $region8: #{tpu_custom_call.1} parent=1 // pred_region
      %28 = vsyncadd [#allocation7], 0
      %s30 = sshll.u32 %s1, 4
      %s31 = int_to_ptr.vmem [resolvable:$true] %s30
      %33 = dma.vmem_to_smem %s31, 16, [#allocation8], [#allocation7]
    $region9: #{tpu_custom_call.1} parent=1 // pred_fallthru
      _
    // Predicated region
    $region10: #{tpu_custom_call.1} parent=1 // pred_check
      _
    $region11: #{tpu_custom_call.1} parent=1 // pred_check_branch
      %35 = sbr.rel (0) target = $region13
    $region12: #{tpu_custom_call.1} parent=1 // pred_region
      _
    $region13: #{tpu_custom_call.1} parent=1 // pred_fallthru
      _
    // Predicated region
    $region14: #{tpu_custom_call.1} parent=1 // pred_check
      _
    $region15: #{tpu_custom_call.1} parent=1 // pred_check_branch
      %37 = sbr.rel (0) target = $region17
    $region16: #{tpu_custom_call.1} parent=1 // pred_region
      %39 = dma.done [#allocation5], 256
    $region17: #{tpu_custom_call.1} parent=1 // pred_fallthru
      _
    // Predicated region
    $region18: #{tpu_custom_call.1} parent=1 // pred_check
      _
    $region19: #{tpu_custom_call.1} parent=1 // pred_check_branch
      %41 = sbr.rel (0) target = $region21
    $region20: #{tpu_custom_call.1} parent=1 // pred_region
      %43 = dma.done [#allocation7], 16
    $region21: #{tpu_custom_call.1} parent=1 // pred_fallthru
      _
    %44 = sfence
    %vm45 = vcmask 310272
    %46 = vst.msk [vmem:[#allocation2] sm:$0xff] %vm45, 0.0
    %47 = vst.msk [vmem:[#allocation2 + $0x8] sm:$0xff] %vm45, 0.0
    %48 = vst.msk [vmem:[#allocation2 + $0x10] sm:$0xff] %vm45, 0.0
    %vm49 = vcmask 306176
    %50 = vst.msk [vmem:[#allocation2 + $0x18] sm:$0xf] %vm49, 0.0
    %v51 = vld [vmem:[#allocation4] sm:$0xff]
    %53 = vrot.lane.b32.xlu0 %v51, 3
    %v54 = vpop.permute.xlu0 %53
    %vm56 = vcmask 285720
    %57 = vst.msk [vmem:[#allocation2 + $0x3] sm:$0xff] %vm56, %v54
    %v58 = vld [vmem:[#allocation4 + $0x8] sm:$0xff]
    %60 = vrot.lane.b32.xlu0 %v58, 3
    %v61 = vpop.permute.xlu0 %60
    %63 = vst.msk [vmem:[#allocation2 + $0x11] sm:$0xff] %vm56, %v61
    %v64 = vld [vmem:[#allocation2] sm:$0xff]
    %v65 = vld [vmem:[#allocation2 + $0x8] sm:$0xff]
    %v66 = vld [vmem:[#allocation2 + $0x10] sm:$0xff]
    %v67 = vld [vmem:[#allocation2 + $0x18] sm:$0xf]
    %s68 = sld [smem:[#allocation8]]
    %v69 = vstv %s68
    %v70 = vmul.f32 %v69, %v64
    %v71 = vmul.f32 %v69, %v65
    %v72 = vmul.f32 %v69, %v66
    %v73 = vadd.f32 %v70, 0.0
    %v74 = vadd.f32 %v71, 0.0
    %v75 = vadd.f32 %v72, 0.0
    %s76 = sld [smem:[#allocation8 + $0x7]]
    %v77 = vstv %s76
    %v78 = vmul.f32 %v77, %v64
    %v79 = vmul.f32 %v77, %v65
    %v80 = vmul.f32 %v77, %v66
    %vm84 = vcmask 1046528
    %v85 = vrot.slane %v78, 1
    %v86 = vrot.slane %v79, 1
    %v87 = vsel %vm84, %v85, %v86
    %v88 = vrot.slane %v80, 1
    %v89 = vsel %vm84, %v86, %v88
    %v93 = vadd.f32 %v73, %v87
    %v94 = vadd.f32 %v74, %v89
    %v95 = vadd.f32 %v75, %v88
    %s96 = sld [smem:[#allocation8 + $0xe]]
    %v97 = vstv %s96
    %v98 = vmul.f32 %v97, %v64
    %v99 = vmul.f32 %v97, %v65
    %v100 = vmul.f32 %v97, %v66
    %vm104 = vcmask 1045504
    %v105 = vrot.slane %v98, 2
    %v106 = vrot.slane %v99, 2
    %v107 = vsel %vm104, %v105, %v106
    %v108 = vrot.slane %v100, 2
    %v109 = vsel %vm104, %v106, %v108
    %v113 = vadd.f32 %v93, %v107
    %v114 = vadd.f32 %v94, %v109
    %v115 = vadd.f32 %v95, %v108
    %s116 = sld [smem:[#allocation8 + $0x15]]
    %v117 = vstv %s116
    %v118 = vmul.f32 %v117, %v64
    %v119 = vmul.f32 %v117, %v65
    %v120 = vmul.f32 %v117, %v66
    %v121 = vmul.f32 %v117, %v67
    %vm126 = vcmask 1044480
    %v127 = vrot.slane %v118, 3
    %v128 = vrot.slane %v119, 3
    %v129 = vsel %vm126, %v127, %v128
    %v130 = vrot.slane %v120, 3
    %v131 = vsel %vm126, %v128, %v130
    %v132 = vrot.slane %v121, 3
    %v133 = vsel %vm126, %v130, %v132
    %v137 = vadd.f32 %v113, %v129
    %v138 = vadd.f32 %v114, %v131
    %v139 = vadd.f32 %v115, %v133
    %s140 = sld [smem:[#allocation8 + $0x1c]]
    %v141 = vstv %s140
    %v142 = vmul.f32 %v141, %v64
    %v143 = vmul.f32 %v141, %v65
    %v144 = vmul.f32 %v141, %v66
    %v145 = vmul.f32 %v141, %v67
    %vm150 = vcmask 1043456
    %v151 = vrot.slane %v142, 4
    %v152 = vrot.slane %v143, 4
    %v153 = vsel %vm150, %v151, %v152
    %v154 = vrot.slane %v144, 4
    %v155 = vsel %vm150, %v152, %v154
    %v156 = vrot.slane %v145, 4
    %v157 = vsel %vm150, %v154, %v156
    %v161 = vadd.f32 %v137, %v153
    %v162 = vadd.f32 %v138, %v155
    %v163 = vadd.f32 %v139, %v157
    %s164 = sld [smem:[#allocation8 + $0x23]]
    %v165 = vstv %s164
    %v166 = vmul.f32 %v165, %v64
    %v167 = vmul.f32 %v165, %v65
    %v168 = vmul.f32 %v165, %v66
    %v169 = vmul.f32 %v165, %v67
    %vm174 = vcmask 1042432
    %v175 = vrot.slane %v166, 5
    %v176 = vrot.slane %v167, 5
    %v177 = vsel %vm174, %v175, %v176
    %v178 = vrot.slane %v168, 5
    %v179 = vsel %vm174, %v176, %v178
    %v180 = vrot.slane %v169, 5
    %v181 = vsel %vm174, %v178, %v180
    %v185 = vadd.f32 %v161, %v177
    %v186 = vadd.f32 %v162, %v179
    %v187 = vadd.f32 %v163, %v181
    %s188 = sld [smem:[#allocation8 + $0x2a]]
    %v189 = vstv %s188
    %v190 = vmul.f32 %v189, %v64
    %v191 = vmul.f32 %v189, %v65
    %v192 = vmul.f32 %v189, %v66
    %v193 = vmul.f32 %v189, %v67
    %vm198 = vcmask 1041408
    %v199 = vrot.slane %v190, 6
    %v200 = vrot.slane %v191, 6
    %v201 = vsel %vm198, %v199, %v200
    %v202 = vrot.slane %v192, 6
    %v203 = vsel %vm198, %v200, %v202
    %v204 = vrot.slane %v193, 6
    %v205 = vsel %vm198, %v202, %v204
    %v209 = vadd.f32 %v185, %v201
    %v210 = vadd.f32 %v186, %v203
    %v211 = vadd.f32 %v187, %v205
    %s212 = sld [smem:[#allocation8 + $0x1]]
    %v213 = vstv %s212
    %v214 = vmul.f32 %v213, %v64
    %v215 = vmul.f32 %v213, %v65
    %v216 = vmul.f32 %v213, %v66
    %220 = vrot.lane.b32.xlu0 %v214, 127
    %v221 = vpop.permute.xlu0 %220
    %222 = vrot.lane.b32.xlu0 %v215, 127
    %v223 = vpop.permute.xlu0 %222
    %224 = vrot.lane.b32.xlu0 %v216, 127
    %v225 = vpop.permute.xlu0 %224
    %v229 = vadd.f32 %v209, %v221
    %v230 = vadd.f32 %v210, %v223
    %v231 = vadd.f32 %v211, %v225
    %s232 = sld [smem:[#allocation8 + $0x8]]
    %v233 = vstv %s232
    %v234 = vmul.f32 %v233, %v64
    %v235 = vmul.f32 %v233, %v65
    %v236 = vmul.f32 %v233, %v66
    %v240 = vrot.slane %v234, 1
    %v241 = vrot.slane %v235, 1
    %v242 = vsel %vm84, %v240, %v241
    %v243 = vrot.slane %v236, 1
    %v244 = vsel %vm84, %v241, %v243
    %245 = vrot.lane.b32.xlu0 %v242, 127
    %v246 = vpop.permute.xlu0 %245
    %247 = vrot.lane.b32.xlu0 %v244, 127
    %v248 = vpop.permute.xlu0 %247
    %249 = vrot.lane.b32.xlu0 %v243, 127
    %v250 = vpop.permute.xlu0 %249
    %v254 = vadd.f32 %v229, %v246
    %v255 = vadd.f32 %v230, %v248
    %v256 = vadd.f32 %v231, %v250
    %s257 = sld [smem:[#allocation8 + $0xf]]
    %v258 = vstv %s257
    %v259 = vmul.f32 %v258, %v64
    %v260 = vmul.f32 %v258, %v65
    %v261 = vmul.f32 %v258, %v66
    %v265 = vrot.slane %v259, 2
    %v266 = vrot.slane %v260, 2
    %v267 = vsel %vm104, %v265, %v266
    %v268 = vrot.slane %v261, 2
    %v269 = vsel %vm104, %v266, %v268
    %270 = vrot.lane.b32.xlu0 %v267, 127
    %v271 = vpop.permute.xlu0 %270
    %272 = vrot.lane.b32.xlu0 %v269, 127
    %v273 = vpop.permute.xlu0 %272
    %274 = vrot.lane.b32.xlu0 %v268, 127
    %v275 = vpop.permute.xlu0 %274
    %v279 = vadd.f32 %v254, %v271
    %v280 = vadd.f32 %v255, %v273
    %v281 = vadd.f32 %v256, %v275
    %s282 = sld [smem:[#allocation8 + $0x16]]
    %v283 = vstv %s282
    %v284 = vmul.f32 %v283, %v64
    %v285 = vmul.f32 %v283, %v65
    %v286 = vmul.f32 %v283, %v66
    %v287 = vmul.f32 %v283, %v67
    %v292 = vrot.slane %v284, 3
    %v293 = vrot.slane %v285, 3
    %v294 = vsel %vm126, %v292, %v293
    %v295 = vrot.slane %v286, 3
    %v296 = vsel %vm126, %v293, %v295
    %v297 = vrot.slane %v287, 3
    %v298 = vsel %vm126, %v295, %v297
    %299 = vrot.lane.b32.xlu0 %v294, 127
    %v300 = vpop.permute.xlu0 %299
    %301 = vrot.lane.b32.xlu0 %v296, 127
    %v302 = vpop.permute.xlu0 %301
    %303 = vrot.lane.b32.xlu0 %v298, 127
    %v304 = vpop.permute.xlu0 %303
    %v308 = vadd.f32 %v279, %v300
    %v309 = vadd.f32 %v280, %v302
    %v310 = vadd.f32 %v281, %v304
    %s311 = sld [smem:[#allocation8 + $0x1d]]
    %v312 = vstv %s311
    %v313 = vmul.f32 %v312, %v64
    %v314 = vmul.f32 %v312, %v65
    %v315 = vmul.f32 %v312, %v66
    %v316 = vmul.f32 %v312, %v67
    %v321 = vrot.slane %v313, 4
    %v322 = vrot.slane %v314, 4
    %v323 = vsel %vm150, %v321, %v322
    %v324 = vrot.slane %v315, 4
    %v325 = vsel %vm150, %v322, %v324
    %v326 = vrot.slane %v316, 4
    %v327 = vsel %vm150, %v324, %v326
    %328 = vrot.lane.b32.xlu0 %v323, 127
    %v329 = vpop.permute.xlu0 %328
    %330 = vrot.lane.b32.xlu0 %v325, 127
    %v331 = vpop.permute.xlu0 %330
    %332 = vrot.lane.b32.xlu0 %v327, 127
    %v333 = vpop.permute.xlu0 %332
    %v337 = vadd.f32 %v308, %v329
    %v338 = vadd.f32 %v309, %v331
    %v339 = vadd.f32 %v310, %v333
    %s340 = sld [smem:[#allocation8 + $0x24]]
    %v341 = vstv %s340
    %v342 = vmul.f32 %v341, %v64
    %v343 = vmul.f32 %v341, %v65
    %v344 = vmul.f32 %v341, %v66
    %v345 = vmul.f32 %v341, %v67
    %v350 = vrot.slane %v342, 5
    %v351 = vrot.slane %v343, 5
    %v352 = vsel %vm174, %v350, %v351
    %v353 = vrot.slane %v344, 5
    %v354 = vsel %vm174, %v351, %v353
    %v355 = vrot.slane %v345, 5
    %v356 = vsel %vm174, %v353, %v355
    %357 = vrot.lane.b32.xlu0 %v352, 127
    %v358 = vpop.permute.xlu0 %357
    %359 = vrot.lane.b32.xlu0 %v354, 127
    %v360 = vpop.permute.xlu0 %359
    %361 = vrot.lane.b32.xlu0 %v356, 127
    %v362 = vpop.permute.xlu0 %361
    %v366 = vadd.f32 %v337, %v358
    %v367 = vadd.f32 %v338, %v360
    %v368 = vadd.f32 %v339, %v362
    %s369 = sld [smem:[#allocation8 + $0x2b]]
    %v370 = vstv %s369
    %v371 = vmul.f32 %v370, %v64
    %v372 = vmul.f32 %v370, %v65
    %v373 = vmul.f32 %v370, %v66
    %v374 = vmul.f32 %v370, %v67
    %v379 = vrot.slane %v371, 6
    %v380 = vrot.slane %v372, 6
    %v381 = vsel %vm198, %v379, %v380
    %v382 = vrot.slane %v373, 6
    %v383 = vsel %vm198, %v380, %v382
    %v384 = vrot.slane %v374, 6
    %v385 = vsel %vm198, %v382, %v384
    %386 = vrot.lane.b32.xlu0 %v381, 127
    %v387 = vpop.permute.xlu0 %386
    %388 = vrot.lane.b32.xlu0 %v383, 127
    %v389 = vpop.permute.xlu0 %388
    %390 = vrot.lane.b32.xlu0 %v385, 127
    %v391 = vpop.permute.xlu0 %390
    %v395 = vadd.f32 %v366, %v387
    %v396 = vadd.f32 %v367, %v389
    %v397 = vadd.f32 %v368, %v391
    %s398 = sld [smem:[#allocation8 + $0x2]]
    %v399 = vstv %s398
    %v400 = vmul.f32 %v399, %v64
    %v401 = vmul.f32 %v399, %v65
    %v402 = vmul.f32 %v399, %v66
    %406 = vrot.lane.b32.xlu0 %v400, 126
    %v407 = vpop.permute.xlu0 %406
    %408 = vrot.lane.b32.xlu0 %v401, 126
    %v409 = vpop.permute.xlu0 %408
    %410 = vrot.lane.b32.xlu0 %v402, 126
    %v411 = vpop.permute.xlu0 %410
    %v415 = vadd.f32 %v395, %v407
    %v416 = vadd.f32 %v396, %v409
    %v417 = vadd.f32 %v397, %v411
    %s418 = sld [smem:[#allocation8 + $0x9]]
    %v419 = vstv %s418
    %v420 = vmul.f32 %v419, %v64
    %v421 = vmul.f32 %v419, %v65
    %v422 = vmul.f32 %v419, %v66
    %v426 = vrot.slane %v420, 1
    %v427 = vrot.slane %v421, 1
    %v428 = vsel %vm84, %v426, %v427
    %v429 = vrot.slane %v422, 1
    %v430 = vsel %vm84, %v427, %v429
    %431 = vrot.lane.b32.xlu0 %v428, 126
    %v432 = vpop.permute.xlu0 %431
    %433 = vrot.lane.b32.xlu0 %v430, 126
    %v434 = vpop.permute.xlu0 %433
    %435 = vrot.lane.b32.xlu0 %v429, 126
    %v436 = vpop.permute.xlu0 %435
    %v440 = vadd.f32 %v415, %v432
    %v441 = vadd.f32 %v416, %v434
    %v442 = vadd.f32 %v417, %v436
    %s443 = sld [smem:[#allocation8 + $0x10]]
    %v444 = vstv %s443
    %v445 = vmul.f32 %v444, %v64
    %v446 = vmul.f32 %v444, %v65
    %v447 = vmul.f32 %v444, %v66
    %v451 = vrot.slane %v445, 2
    %v452 = vrot.slane %v446, 2
    %v453 = vsel %vm104, %v451, %v452
    %v454 = vrot.slane %v447, 2
    %v455 = vsel %vm104, %v452, %v454
    %456 = vrot.lane.b32.xlu0 %v453, 126
    %v457 = vpop.permute.xlu0 %456
    %458 = vrot.lane.b32.xlu0 %v455, 126
    %v459 = vpop.permute.xlu0 %458
    %460 = vrot.lane.b32.xlu0 %v454, 126
    %v461 = vpop.permute.xlu0 %460
    %v465 = vadd.f32 %v440, %v457
    %v466 = vadd.f32 %v441, %v459
    %v467 = vadd.f32 %v442, %v461
    %s468 = sld [smem:[#allocation8 + $0x17]]
    %v469 = vstv %s468
    %v470 = vmul.f32 %v469, %v64
    %v471 = vmul.f32 %v469, %v65
    %v472 = vmul.f32 %v469, %v66
    %v473 = vmul.f32 %v469, %v67
    %v478 = vrot.slane %v470, 3
    %v479 = vrot.slane %v471, 3
    %v480 = vsel %vm126, %v478, %v479
    %v481 = vrot.slane %v472, 3
    %v482 = vsel %vm126, %v479, %v481
    %v483 = vrot.slane %v473, 3
    %v484 = vsel %vm126, %v481, %v483
    %485 = vrot.lane.b32.xlu0 %v480, 126
    %v486 = vpop.permute.xlu0 %485
    %487 = vrot.lane.b32.xlu0 %v482, 126
    %v488 = vpop.permute.xlu0 %487
    %489 = vrot.lane.b32.xlu0 %v484, 126
    %v490 = vpop.permute.xlu0 %489
    %v494 = vadd.f32 %v465, %v486
    %v495 = vadd.f32 %v466, %v488
    %v496 = vadd.f32 %v467, %v490
    %s497 = sld [smem:[#allocation8 + $0x1e]]
    %v498 = vstv %s497
    %v499 = vmul.f32 %v498, %v64
    %v500 = vmul.f32 %v498, %v65
    %v501 = vmul.f32 %v498, %v66
    %v502 = vmul.f32 %v498, %v67
    %v507 = vrot.slane %v499, 4
    %v508 = vrot.slane %v500, 4
    %v509 = vsel %vm150, %v507, %v508
    %v510 = vrot.slane %v501, 4
    %v511 = vsel %vm150, %v508, %v510
    %v512 = vrot.slane %v502, 4
    %v513 = vsel %vm150, %v510, %v512
    %514 = vrot.lane.b32.xlu0 %v509, 126
    %v515 = vpop.permute.xlu0 %514
    %516 = vrot.lane.b32.xlu0 %v511, 126
    %v517 = vpop.permute.xlu0 %516
    %518 = vrot.lane.b32.xlu0 %v513, 126
    %v519 = vpop.permute.xlu0 %518
    %v523 = vadd.f32 %v494, %v515
    %v524 = vadd.f32 %v495, %v517
    %v525 = vadd.f32 %v496, %v519
    %s526 = sld [smem:[#allocation8 + $0x25]]
    %v527 = vstv %s526
    %v528 = vmul.f32 %v527, %v64
    %v529 = vmul.f32 %v527, %v65
    %v530 = vmul.f32 %v527, %v66
    %v531 = vmul.f32 %v527, %v67
    %v536 = vrot.slane %v528, 5
    %v537 = vrot.slane %v529, 5
    %v538 = vsel %vm174, %v536, %v537
    %v539 = vrot.slane %v530, 5
    %v540 = vsel %vm174, %v537, %v539
    %v541 = vrot.slane %v531, 5
    %v542 = vsel %vm174, %v539, %v541
    %543 = vrot.lane.b32.xlu0 %v538, 126
    %v544 = vpop.permute.xlu0 %543
    %545 = vrot.lane.b32.xlu0 %v540, 126
    %v546 = vpop.permute.xlu0 %545
    %547 = vrot.lane.b32.xlu0 %v542, 126
    %v548 = vpop.permute.xlu0 %547
    %v552 = vadd.f32 %v523, %v544
    %v553 = vadd.f32 %v524, %v546
    %v554 = vadd.f32 %v525, %v548
    %s555 = sld [smem:[#allocation8 + $0x2c]]
    %v556 = vstv %s555
    %v557 = vmul.f32 %v556, %v64
    %v558 = vmul.f32 %v556, %v65
    %v559 = vmul.f32 %v556, %v66
    %v560 = vmul.f32 %v556, %v67
    %v565 = vrot.slane %v557, 6
    %v566 = vrot.slane %v558, 6
    %v567 = vsel %vm198, %v565, %v566
    %v568 = vrot.slane %v559, 6
    %v569 = vsel %vm198, %v566, %v568
    %v570 = vrot.slane %v560, 6
    %v571 = vsel %vm198, %v568, %v570
    %572 = vrot.lane.b32.xlu0 %v567, 126
    %v573 = vpop.permute.xlu0 %572
    %574 = vrot.lane.b32.xlu0 %v569, 126
    %v575 = vpop.permute.xlu0 %574
    %576 = vrot.lane.b32.xlu0 %v571, 126
    %v577 = vpop.permute.xlu0 %576
    %v581 = vadd.f32 %v552, %v573
    %v582 = vadd.f32 %v553, %v575
    %v583 = vadd.f32 %v554, %v577
    %s584 = sld [smem:[#allocation8 + $0x3]]
    %v585 = vstv %s584
    %v586 = vmul.f32 %v585, %v64
    %v587 = vmul.f32 %v585, %v65
    %v588 = vmul.f32 %v585, %v66
    %592 = vrot.lane.b32.xlu0 %v586, 125
    %v593 = vpop.permute.xlu0 %592
    %594 = vrot.lane.b32.xlu0 %v587, 125
    %v595 = vpop.permute.xlu0 %594
    %596 = vrot.lane.b32.xlu0 %v588, 125
    %v597 = vpop.permute.xlu0 %596
    %v601 = vadd.f32 %v581, %v593
    %v602 = vadd.f32 %v582, %v595
    %v603 = vadd.f32 %v583, %v597
    %s604 = sld [smem:[#allocation8 + $0xa]]
    %v605 = vstv %s604
    %v606 = vmul.f32 %v605, %v64
    %v607 = vmul.f32 %v605, %v65
    %v608 = vmul.f32 %v605, %v66
    %v612 = vrot.slane %v606, 1
    %v613 = vrot.slane %v607, 1
    %v614 = vsel %vm84, %v612, %v613
    %v615 = vrot.slane %v608, 1
    %v616 = vsel %vm84, %v613, %v615
    %617 = vrot.lane.b32.xlu0 %v614, 125
    %v618 = vpop.permute.xlu0 %617
    %619 = vrot.lane.b32.xlu0 %v616, 125
    %v620 = vpop.permute.xlu0 %619
    %621 = vrot.lane.b32.xlu0 %v615, 125
    %v622 = vpop.permute.xlu0 %621
    %v626 = vadd.f32 %v601, %v618
    %v627 = vadd.f32 %v602, %v620
    %v628 = vadd.f32 %v603, %v622
    %s629 = sld [smem:[#allocation8 + $0x11]]
    %v630 = vstv %s629
    %v631 = vmul.f32 %v630, %v64
    %v632 = vmul.f32 %v630, %v65
    %v633 = vmul.f32 %v630, %v66
    %v637 = vrot.slane %v631, 2
    %v638 = vrot.slane %v632, 2
    %v639 = vsel %vm104, %v637, %v638
    %v640 = vrot.slane %v633, 2
    %v641 = vsel %vm104, %v638, %v640
    %642 = vrot.lane.b32.xlu0 %v639, 125
    %v643 = vpop.permute.xlu0 %642
    %644 = vrot.lane.b32.xlu0 %v641, 125
    %v645 = vpop.permute.xlu0 %644
    %646 = vrot.lane.b32.xlu0 %v640, 125
    %v647 = vpop.permute.xlu0 %646
    %v651 = vadd.f32 %v626, %v643
    %v652 = vadd.f32 %v627, %v645
    %v653 = vadd.f32 %v628, %v647
    %s654 = sld [smem:[#allocation8 + $0x18]]
    %v655 = vstv %s654
    %v656 = vmul.f32 %v655, %v64
    %v657 = vmul.f32 %v655, %v65
    %v658 = vmul.f32 %v655, %v66
    %v659 = vmul.f32 %v655, %v67
    %v664 = vrot.slane %v656, 3
    %v665 = vrot.slane %v657, 3
    %v666 = vsel %vm126, %v664, %v665
    %v667 = vrot.slane %v658, 3
    %v668 = vsel %vm126, %v665, %v667
    %v669 = vrot.slane %v659, 3
    %v670 = vsel %vm126, %v667, %v669
    %671 = vrot.lane.b32.xlu0 %v666, 125
    %v672 = vpop.permute.xlu0 %671
    %673 = vrot.lane.b32.xlu0 %v668, 125
    %v674 = vpop.permute.xlu0 %673
    %675 = vrot.lane.b32.xlu0 %v670, 125
    %v676 = vpop.permute.xlu0 %675
    %v680 = vadd.f32 %v651, %v672
    %v681 = vadd.f32 %v652, %v674
    %v682 = vadd.f32 %v653, %v676
    %s683 = sld [smem:[#allocation8 + $0x1f]]
    %v684 = vstv %s683
    %v685 = vmul.f32 %v684, %v64
    %v686 = vmul.f32 %v684, %v65
    %v687 = vmul.f32 %v684, %v66
    %v688 = vmul.f32 %v684, %v67
    %v693 = vrot.slane %v685, 4
    %v694 = vrot.slane %v686, 4
    %v695 = vsel %vm150, %v693, %v694
    %v696 = vrot.slane %v687, 4
    %v697 = vsel %vm150, %v694, %v696
    %v698 = vrot.slane %v688, 4
    %v699 = vsel %vm150, %v696, %v698
    %700 = vrot.lane.b32.xlu0 %v695, 125
    %v701 = vpop.permute.xlu0 %700
    %702 = vrot.lane.b32.xlu0 %v697, 125
    %v703 = vpop.permute.xlu0 %702
    %704 = vrot.lane.b32.xlu0 %v699, 125
    %v705 = vpop.permute.xlu0 %704
    %v709 = vadd.f32 %v680, %v701
    %v710 = vadd.f32 %v681, %v703
    %v711 = vadd.f32 %v682, %v705
    %s712 = sld [smem:[#allocation8 + $0x26]]
    %v713 = vstv %s712
    %v714 = vmul.f32 %v713, %v64
    %v715 = vmul.f32 %v713, %v65
    %v716 = vmul.f32 %v713, %v66
    %v717 = vmul.f32 %v713, %v67
    %v722 = vrot.slane %v714, 5
    %v723 = vrot.slane %v715, 5
    %v724 = vsel %vm174, %v722, %v723
    %v725 = vrot.slane %v716, 5
    %v726 = vsel %vm174, %v723, %v725
    %v727 = vrot.slane %v717, 5
    %v728 = vsel %vm174, %v725, %v727
    %729 = vrot.lane.b32.xlu0 %v724, 125
    %v730 = vpop.permute.xlu0 %729
    %731 = vrot.lane.b32.xlu0 %v726, 125
    %v732 = vpop.permute.xlu0 %731
    %733 = vrot.lane.b32.xlu0 %v728, 125
    %v734 = vpop.permute.xlu0 %733
    %v738 = vadd.f32 %v709, %v730
    %v739 = vadd.f32 %v710, %v732
    %v740 = vadd.f32 %v711, %v734
    %s741 = sld [smem:[#allocation8 + $0x2d]]
    %v742 = vstv %s741
    %v743 = vmul.f32 %v742, %v64
    %v744 = vmul.f32 %v742, %v65
    %v745 = vmul.f32 %v742, %v66
    %v746 = vmul.f32 %v742, %v67
    %v751 = vrot.slane %v743, 6
    %v752 = vrot.slane %v744, 6
    %v753 = vsel %vm198, %v751, %v752
    %v754 = vrot.slane %v745, 6
    %v755 = vsel %vm198, %v752, %v754
    %v756 = vrot.slane %v746, 6
    %v757 = vsel %vm198, %v754, %v756
    %758 = vrot.lane.b32.xlu0 %v753, 125
    %v759 = vpop.permute.xlu0 %758
    %760 = vrot.lane.b32.xlu0 %v755, 125
    %v761 = vpop.permute.xlu0 %760
    %762 = vrot.lane.b32.xlu0 %v757, 125
    %v763 = vpop.permute.xlu0 %762
    %v767 = vadd.f32 %v738, %v759
    %v768 = vadd.f32 %v739, %v761
    %v769 = vadd.f32 %v740, %v763
    %s770 = sld [smem:[#allocation8 + $0x4]]
    %v771 = vstv %s770
    %v772 = vmul.f32 %v771, %v64
    %v773 = vmul.f32 %v771, %v65
    %v774 = vmul.f32 %v771, %v66
    %778 = vrot.lane.b32.xlu0 %v772, 124
    %v779 = vpop.permute.xlu0 %778
    %780 = vrot.lane.b32.xlu0 %v773, 124
    %v781 = vpop.permute.xlu0 %780
    %782 = vrot.lane.b32.xlu0 %v774, 124
    %v783 = vpop.permute.xlu0 %782
    %v787 = vadd.f32 %v767, %v779
    %v788 = vadd.f32 %v768, %v781
    %v789 = vadd.f32 %v769, %v783
    %s790 = sld [smem:[#allocation8 + $0xb]]
    %v791 = vstv %s790
    %v792 = vmul.f32 %v791, %v64
    %v793 = vmul.f32 %v791, %v65
    %v794 = vmul.f32 %v791, %v66
    %v798 = vrot.slane %v792, 1
    %v799 = vrot.slane %v793, 1
    %v800 = vsel %vm84, %v798, %v799
    %v801 = vrot.slane %v794, 1
    %v802 = vsel %vm84, %v799, %v801
    %803 = vrot.lane.b32.xlu0 %v800, 124
    %v804 = vpop.permute.xlu0 %803
    %805 = vrot.lane.b32.xlu0 %v802, 124
    %v806 = vpop.permute.xlu0 %805
    %807 = vrot.lane.b32.xlu0 %v801, 124
    %v808 = vpop.permute.xlu0 %807
    %v812 = vadd.f32 %v787, %v804
    %v813 = vadd.f32 %v788, %v806
    %v814 = vadd.f32 %v789, %v808
    %s815 = sld [smem:[#allocation8 + $0x12]]
    %v816 = vstv %s815
    %v817 = vmul.f32 %v816, %v64
    %v818 = vmul.f32 %v816, %v65
    %v819 = vmul.f32 %v816, %v66
    %v823 = vrot.slane %v817, 2
    %v824 = vrot.slane %v818, 2
    %v825 = vsel %vm104, %v823, %v824
    %v826 = vrot.slane %v819, 2
    %v827 = vsel %vm104, %v824, %v826
    %828 = vrot.lane.b32.xlu0 %v825, 124
    %v829 = vpop.permute.xlu0 %828
    %830 = vrot.lane.b32.xlu0 %v827, 124
    %v831 = vpop.permute.xlu0 %830
    %832 = vrot.lane.b32.xlu0 %v826, 124
    %v833 = vpop.permute.xlu0 %832
    %v837 = vadd.f32 %v812, %v829
    %v838 = vadd.f32 %v813, %v831
    %v839 = vadd.f32 %v814, %v833
    %s840 = sld [smem:[#allocation8 + $0x19]]
    %v841 = vstv %s840
    %v842 = vmul.f32 %v841, %v64
    %v843 = vmul.f32 %v841, %v65
    %v844 = vmul.f32 %v841, %v66
    %v845 = vmul.f32 %v841, %v67
    %v850 = vrot.slane %v842, 3
    %v851 = vrot.slane %v843, 3
    %v852 = vsel %vm126, %v850, %v851
    %v853 = vrot.slane %v844, 3
    %v854 = vsel %vm126, %v851, %v853
    %v855 = vrot.slane %v845, 3
    %v856 = vsel %vm126, %v853, %v855
    %857 = vrot.lane.b32.xlu0 %v852, 124
    %v858 = vpop.permute.xlu0 %857
    %859 = vrot.lane.b32.xlu0 %v854, 124
    %v860 = vpop.permute.xlu0 %859
    %861 = vrot.lane.b32.xlu0 %v856, 124
    %v862 = vpop.permute.xlu0 %861
    %v866 = vadd.f32 %v837, %v858
    %v867 = vadd.f32 %v838, %v860
    %v868 = vadd.f32 %v839, %v862
    %s869 = sld [smem:[#allocation8 + $0x20]]
    %v870 = vstv %s869
    %v871 = vmul.f32 %v870, %v64
    %v872 = vmul.f32 %v870, %v65
    %v873 = vmul.f32 %v870, %v66
    %v874 = vmul.f32 %v870, %v67
    %v879 = vrot.slane %v871, 4
    %v880 = vrot.slane %v872, 4
    %v881 = vsel %vm150, %v879, %v880
    %v882 = vrot.slane %v873, 4
    %v883 = vsel %vm150, %v880, %v882
    %v884 = vrot.slane %v874, 4
    %v885 = vsel %vm150, %v882, %v884
    %886 = vrot.lane.b32.xlu0 %v881, 124
    %v887 = vpop.permute.xlu0 %886
    %888 = vrot.lane.b32.xlu0 %v883, 124
    %v889 = vpop.permute.xlu0 %888
    %890 = vrot.lane.b32.xlu0 %v885, 124
    %v891 = vpop.permute.xlu0 %890
    %v895 = vadd.f32 %v866, %v887
    %v896 = vadd.f32 %v867, %v889
    %v897 = vadd.f32 %v868, %v891
    %s898 = sld [smem:[#allocation8 + $0x27]]
    %v899 = vstv %s898
    %v900 = vmul.f32 %v899, %v64
    %v901 = vmul.f32 %v899, %v65
    %v902 = vmul.f32 %v899, %v66
    %v903 = vmul.f32 %v899, %v67
    %v908 = vrot.slane %v900, 5
    %v909 = vrot.slane %v901, 5
    %v910 = vsel %vm174, %v908, %v909
    %v911 = vrot.slane %v902, 5
    %v912 = vsel %vm174, %v909, %v911
    %v913 = vrot.slane %v903, 5
    %v914 = vsel %vm174, %v911, %v913
    %915 = vrot.lane.b32.xlu0 %v910, 124
    %v916 = vpop.permute.xlu0 %915
    %917 = vrot.lane.b32.xlu0 %v912, 124
    %v918 = vpop.permute.xlu0 %917
    %919 = vrot.lane.b32.xlu0 %v914, 124
    %v920 = vpop.permute.xlu0 %919
    %v924 = vadd.f32 %v895, %v916
    %v925 = vadd.f32 %v896, %v918
    %v926 = vadd.f32 %v897, %v920
    %s927 = sld [smem:[#allocation8 + $0x2e]]
    %v928 = vstv %s927
    %v929 = vmul.f32 %v928, %v64
    %v930 = vmul.f32 %v928, %v65
    %v931 = vmul.f32 %v928, %v66
    %v932 = vmul.f32 %v928, %v67
    %v937 = vrot.slane %v929, 6
    %v938 = vrot.slane %v930, 6
    %v939 = vsel %vm198, %v937, %v938
    %v940 = vrot.slane %v931, 6
    %v941 = vsel %vm198, %v938, %v940
    %v942 = vrot.slane %v932, 6
    %v943 = vsel %vm198, %v940, %v942
    %944 = vrot.lane.b32.xlu0 %v939, 124
    %v945 = vpop.permute.xlu0 %944
    %946 = vrot.lane.b32.xlu0 %v941, 124
    %v947 = vpop.permute.xlu0 %946
    %948 = vrot.lane.b32.xlu0 %v943, 124
    %v949 = vpop.permute.xlu0 %948
    %v953 = vadd.f32 %v924, %v945
    %v954 = vadd.f32 %v925, %v947
    %v955 = vadd.f32 %v926, %v949
    %s956 = sld [smem:[#allocation8 + $0x5]]
    %v957 = vstv %s956
    %v958 = vmul.f32 %v957, %v64
    %v959 = vmul.f32 %v957, %v65
    %v960 = vmul.f32 %v957, %v66
    %964 = vrot.lane.b32.xlu0 %v958, 123
    %v965 = vpop.permute.xlu0 %964
    %966 = vrot.lane.b32.xlu0 %v959, 123
    %v967 = vpop.permute.xlu0 %966
    %968 = vrot.lane.b32.xlu0 %v960, 123
    %v969 = vpop.permute.xlu0 %968
    %v973 = vadd.f32 %v953, %v965
    %v974 = vadd.f32 %v954, %v967
    %v975 = vadd.f32 %v955, %v969
    %s976 = sld [smem:[#allocation8 + $0xc]]
    %v977 = vstv %s976
    %v978 = vmul.f32 %v977, %v64
    %v979 = vmul.f32 %v977, %v65
    %v980 = vmul.f32 %v977, %v66
    %v984 = vrot.slane %v978, 1
    %v985 = vrot.slane %v979, 1
    %v986 = vsel %vm84, %v984, %v985
    %v987 = vrot.slane %v980, 1
    %v988 = vsel %vm84, %v985, %v987
    %989 = vrot.lane.b32.xlu0 %v986, 123
    %v990 = vpop.permute.xlu0 %989
    %991 = vrot.lane.b32.xlu0 %v988, 123
    %v992 = vpop.permute.xlu0 %991
    %993 = vrot.lane.b32.xlu0 %v987, 123
    %v994 = vpop.permute.xlu0 %993
    %v998 = vadd.f32 %v973, %v990
    %v999 = vadd.f32 %v974, %v992
    %v1000 = vadd.f32 %v975, %v994
    %s1001 = sld [smem:[#allocation8 + $0x13]]
    %v1002 = vstv %s1001
    %v1003 = vmul.f32 %v1002, %v64
    %v1004 = vmul.f32 %v1002, %v65
    %v1005 = vmul.f32 %v1002, %v66
    %v1009 = vrot.slane %v1003, 2
    %v1010 = vrot.slane %v1004, 2
    %v1011 = vsel %vm104, %v1009, %v1010
    %v1012 = vrot.slane %v1005, 2
    %v1013 = vsel %vm104, %v1010, %v1012
    %1014 = vrot.lane.b32.xlu0 %v1011, 123
    %v1015 = vpop.permute.xlu0 %1014
    %1016 = vrot.lane.b32.xlu0 %v1013, 123
    %v1017 = vpop.permute.xlu0 %1016
    %1018 = vrot.lane.b32.xlu0 %v1012, 123
    %v1019 = vpop.permute.xlu0 %1018
    %v1023 = vadd.f32 %v998, %v1015
    %v1024 = vadd.f32 %v999, %v1017
    %v1025 = vadd.f32 %v1000, %v1019
    %s1026 = sld [smem:[#allocation8 + $0x1a]]
    %v1027 = vstv %s1026
    %v1028 = vmul.f32 %v1027, %v64
    %v1029 = vmul.f32 %v1027, %v65
    %v1030 = vmul.f32 %v1027, %v66
    %v1031 = vmul.f32 %v1027, %v67
    %v1036 = vrot.slane %v1028, 3
    %v1037 = vrot.slane %v1029, 3
    %v1038 = vsel %vm126, %v1036, %v1037
    %v1039 = vrot.slane %v1030, 3
    %v1040 = vsel %vm126, %v1037, %v1039
    %v1041 = vrot.slane %v1031, 3
    %v1042 = vsel %vm126, %v1039, %v1041
    %1043 = vrot.lane.b32.xlu0 %v1038, 123
    %v1044 = vpop.permute.xlu0 %1043
    %1045 = vrot.lane.b32.xlu0 %v1040, 123
    %v1046 = vpop.permute.xlu0 %1045
    %1047 = vrot.lane.b32.xlu0 %v1042, 123
    %v1048 = vpop.permute.xlu0 %1047
    %v1052 = vadd.f32 %v1023, %v1044
    %v1053 = vadd.f32 %v1024, %v1046
    %v1054 = vadd.f32 %v1025, %v1048
    %s1055 = sld [smem:[#allocation8 + $0x21]]
    %v1056 = vstv %s1055
    %v1057 = vmul.f32 %v1056, %v64
    %v1058 = vmul.f32 %v1056, %v65
    %v1059 = vmul.f32 %v1056, %v66
    %v1060 = vmul.f32 %v1056, %v67
    %v1065 = vrot.slane %v1057, 4
    %v1066 = vrot.slane %v1058, 4
    %v1067 = vsel %vm150, %v1065, %v1066
    %v1068 = vrot.slane %v1059, 4
    %v1069 = vsel %vm150, %v1066, %v1068
    %v1070 = vrot.slane %v1060, 4
    %v1071 = vsel %vm150, %v1068, %v1070
    %1072 = vrot.lane.b32.xlu0 %v1067, 123
    %v1073 = vpop.permute.xlu0 %1072
    %1074 = vrot.lane.b32.xlu0 %v1069, 123
    %v1075 = vpop.permute.xlu0 %1074
    %1076 = vrot.lane.b32.xlu0 %v1071, 123
    %v1077 = vpop.permute.xlu0 %1076
    %v1081 = vadd.f32 %v1052, %v1073
    %v1082 = vadd.f32 %v1053, %v1075
    %v1083 = vadd.f32 %v1054, %v1077
    %s1084 = sld [smem:[#allocation8 + $0x28]]
    %v1085 = vstv %s1084
    %v1086 = vmul.f32 %v1085, %v64
    %v1087 = vmul.f32 %v1085, %v65
    %v1088 = vmul.f32 %v1085, %v66
    %v1089 = vmul.f32 %v1085, %v67
    %v1094 = vrot.slane %v1086, 5
    %v1095 = vrot.slane %v1087, 5
    %v1096 = vsel %vm174, %v1094, %v1095
    %v1097 = vrot.slane %v1088, 5
    %v1098 = vsel %vm174, %v1095, %v1097
    %v1099 = vrot.slane %v1089, 5
    %v1100 = vsel %vm174, %v1097, %v1099
    %1101 = vrot.lane.b32.xlu0 %v1096, 123
    %v1102 = vpop.permute.xlu0 %1101
    %1103 = vrot.lane.b32.xlu0 %v1098, 123
    %v1104 = vpop.permute.xlu0 %1103
    %1105 = vrot.lane.b32.xlu0 %v1100, 123
    %v1106 = vpop.permute.xlu0 %1105
    %v1110 = vadd.f32 %v1081, %v1102
    %v1111 = vadd.f32 %v1082, %v1104
    %v1112 = vadd.f32 %v1083, %v1106
    %s1113 = sld [smem:[#allocation8 + $0x2f]]
    %v1114 = vstv %s1113
    %v1115 = vmul.f32 %v1114, %v64
    %v1116 = vmul.f32 %v1114, %v65
    %v1117 = vmul.f32 %v1114, %v66
    %v1118 = vmul.f32 %v1114, %v67
    %v1123 = vrot.slane %v1115, 6
    %v1124 = vrot.slane %v1116, 6
    %v1125 = vsel %vm198, %v1123, %v1124
    %v1126 = vrot.slane %v1117, 6
    %v1127 = vsel %vm198, %v1124, %v1126
    %v1128 = vrot.slane %v1118, 6
    %v1129 = vsel %vm198, %v1126, %v1128
    %1130 = vrot.lane.b32.xlu0 %v1125, 123
    %v1131 = vpop.permute.xlu0 %1130
    %1132 = vrot.lane.b32.xlu0 %v1127, 123
    %v1133 = vpop.permute.xlu0 %1132
    %1134 = vrot.lane.b32.xlu0 %v1129, 123
    %v1135 = vpop.permute.xlu0 %1134
    %v1139 = vadd.f32 %v1110, %v1131
    %v1140 = vadd.f32 %v1111, %v1133
    %v1141 = vadd.f32 %v1112, %v1135
    %s1142 = sld [smem:[#allocation8 + $0x6]]
    %v1143 = vstv %s1142
    %v1144 = vmul.f32 %v1143, %v64
    %v1145 = vmul.f32 %v1143, %v65
    %v1146 = vmul.f32 %v1143, %v66
    %1150 = vrot.lane.b32.xlu0 %v1144, 122
    %v1151 = vpop.permute.xlu0 %1150
    %1152 = vrot.lane.b32.xlu0 %v1145, 122
    %v1153 = vpop.permute.xlu0 %1152
    %1154 = vrot.lane.b32.xlu0 %v1146, 122
    %v1155 = vpop.permute.xlu0 %1154
    %v1159 = vadd.f32 %v1139, %v1151
    %v1160 = vadd.f32 %v1140, %v1153
    %v1161 = vadd.f32 %v1141, %v1155
    %s1162 = sld [smem:[#allocation8 + $0xd]]
    %v1163 = vstv %s1162
    %v1164 = vmul.f32 %v1163, %v64
    %v1165 = vmul.f32 %v1163, %v65
    %v1166 = vmul.f32 %v1163, %v66
    %v1170 = vrot.slane %v1164, 1
    %v1171 = vrot.slane %v1165, 1
    %v1172 = vsel %vm84, %v1170, %v1171
    %v1173 = vrot.slane %v1166, 1
    %v1174 = vsel %vm84, %v1171, %v1173
    %1175 = vrot.lane.b32.xlu0 %v1172, 122
    %v1176 = vpop.permute.xlu0 %1175
    %1177 = vrot.lane.b32.xlu0 %v1174, 122
    %v1178 = vpop.permute.xlu0 %1177
    %1179 = vrot.lane.b32.xlu0 %v1173, 122
    %v1180 = vpop.permute.xlu0 %1179
    %v1184 = vadd.f32 %v1159, %v1176
    %v1185 = vadd.f32 %v1160, %v1178
    %v1186 = vadd.f32 %v1161, %v1180
    %s1187 = sld [smem:[#allocation8 + $0x14]]
    %v1188 = vstv %s1187
    %v1189 = vmul.f32 %v1188, %v64
    %v1190 = vmul.f32 %v1188, %v65
    %v1191 = vmul.f32 %v1188, %v66
    %v1195 = vrot.slane %v1189, 2
    %v1196 = vrot.slane %v1190, 2
    %v1197 = vsel %vm104, %v1195, %v1196
    %v1198 = vrot.slane %v1191, 2
    %v1199 = vsel %vm104, %v1196, %v1198
    %1200 = vrot.lane.b32.xlu0 %v1197, 122
    %v1201 = vpop.permute.xlu0 %1200
    %1202 = vrot.lane.b32.xlu0 %v1199, 122
    %v1203 = vpop.permute.xlu0 %1202
    %1204 = vrot.lane.b32.xlu0 %v1198, 122
    %v1205 = vpop.permute.xlu0 %1204
    %v1209 = vadd.f32 %v1184, %v1201
    %v1210 = vadd.f32 %v1185, %v1203
    %v1211 = vadd.f32 %v1186, %v1205
    %s1212 = sld [smem:[#allocation8 + $0x1b]]
    %v1213 = vstv %s1212
    %v1214 = vmul.f32 %v1213, %v64
    %v1215 = vmul.f32 %v1213, %v65
    %v1216 = vmul.f32 %v1213, %v66
    %v1217 = vmul.f32 %v1213, %v67
    %v1222 = vrot.slane %v1214, 3
    %v1223 = vrot.slane %v1215, 3
    %v1224 = vsel %vm126, %v1222, %v1223
    %v1225 = vrot.slane %v1216, 3
    %v1226 = vsel %vm126, %v1223, %v1225
    %v1227 = vrot.slane %v1217, 3
    %v1228 = vsel %vm126, %v1225, %v1227
    %1229 = vrot.lane.b32.xlu0 %v1224, 122
    %v1230 = vpop.permute.xlu0 %1229
    %1231 = vrot.lane.b32.xlu0 %v1226, 122
    %v1232 = vpop.permute.xlu0 %1231
    %1233 = vrot.lane.b32.xlu0 %v1228, 122
    %v1234 = vpop.permute.xlu0 %1233
    %v1238 = vadd.f32 %v1209, %v1230
    %v1239 = vadd.f32 %v1210, %v1232
    %v1240 = vadd.f32 %v1211, %v1234
    %s1241 = sld [smem:[#allocation8 + $0x22]]
    %v1242 = vstv %s1241
    %v1243 = vmul.f32 %v1242, %v64
    %v1244 = vmul.f32 %v1242, %v65
    %v1245 = vmul.f32 %v1242, %v66
    %v1246 = vmul.f32 %v1242, %v67
    %v1251 = vrot.slane %v1243, 4
    %v1252 = vrot.slane %v1244, 4
    %v1253 = vsel %vm150, %v1251, %v1252
    %v1254 = vrot.slane %v1245, 4
    %v1255 = vsel %vm150, %v1252, %v1254
    %v1256 = vrot.slane %v1246, 4
    %v1257 = vsel %vm150, %v1254, %v1256
    %1258 = vrot.lane.b32.xlu0 %v1253, 122
    %v1259 = vpop.permute.xlu0 %1258
    %1260 = vrot.lane.b32.xlu0 %v1255, 122
    %v1261 = vpop.permute.xlu0 %1260
    %1262 = vrot.lane.b32.xlu0 %v1257, 122
    %v1263 = vpop.permute.xlu0 %1262
    %v1267 = vadd.f32 %v1238, %v1259
    %v1268 = vadd.f32 %v1239, %v1261
    %v1269 = vadd.f32 %v1240, %v1263
    %s1270 = sld [smem:[#allocation8 + $0x29]]
    %v1271 = vstv %s1270
    %v1272 = vmul.f32 %v1271, %v64
    %v1273 = vmul.f32 %v1271, %v65
    %v1274 = vmul.f32 %v1271, %v66
    %v1275 = vmul.f32 %v1271, %v67
    %v1280 = vrot.slane %v1272, 5
    %v1281 = vrot.slane %v1273, 5
    %v1282 = vsel %vm174, %v1280, %v1281
    %v1283 = vrot.slane %v1274, 5
    %v1284 = vsel %vm174, %v1281, %v1283
    %v1285 = vrot.slane %v1275, 5
    %v1286 = vsel %vm174, %v1283, %v1285
    %1287 = vrot.lane.b32.xlu0 %v1282, 122
    %v1288 = vpop.permute.xlu0 %1287
    %1289 = vrot.lane.b32.xlu0 %v1284, 122
    %v1290 = vpop.permute.xlu0 %1289
    %1291 = vrot.lane.b32.xlu0 %v1286, 122
    %v1292 = vpop.permute.xlu0 %1291
    %v1296 = vadd.f32 %v1267, %v1288
    %v1297 = vadd.f32 %v1268, %v1290
    %v1298 = vadd.f32 %v1269, %v1292
    %s1299 = sld [smem:[#allocation8 + $0x30]]
    %v1300 = vstv %s1299
    %v1301 = vmul.f32 %v1300, %v64
    %v1302 = vmul.f32 %v1300, %v65
    %v1303 = vmul.f32 %v1300, %v66
    %v1304 = vmul.f32 %v1300, %v67
    %v1309 = vrot.slane %v1301, 6
    %v1310 = vrot.slane %v1302, 6
    %v1311 = vsel %vm198, %v1309, %v1310
    %v1312 = vrot.slane %v1303, 6
    %v1313 = vsel %vm198, %v1310, %v1312
    %v1314 = vrot.slane %v1304, 6
    %v1315 = vsel %vm198, %v1312, %v1314
    %1316 = vrot.lane.b32.xlu0 %v1311, 122
    %v1317 = vpop.permute.xlu0 %1316
    %1318 = vrot.lane.b32.xlu0 %v1313, 122
    %v1319 = vpop.permute.xlu0 %1318
    %1320 = vrot.lane.b32.xlu0 %v1315, 122
    %v1321 = vpop.permute.xlu0 %1320
    %v1325 = vadd.f32 %v1296, %v1317
    %v1326 = vadd.f32 %v1297, %v1319
    %v1327 = vadd.f32 %v1298, %v1321
    %s1328 = sld [smem:[#allocation3]]
    %v1329 = vstv %s1328
    %v1330 = vadd.f32 %v1325, %v1329
    %v1331 = vadd.f32 %v1326, %v1329
    %v1332 = vadd.f32 %v1327, %v1329
    %v1335 = vrot.slane %v1331, 6
    %v1336 = vrot.slane %v1332, 6
    %v1337 = vsel %vm198, %v1335, %v1336
    %v1339 = vmul.f32 %v1330, 0.5
    %v1340 = vmul.f32 %v1337, 0.5
    %v1341 = vmul.f32 %v1330, 0.70710677
    %v1342 = vmul.f32 %v1337, 0.70710677
    %v1343 = vand.u32 2147483647, %v1341
    %v1344 = vand.u32 2147483647, %v1342
    %v1345 = vmul.f32 %v1343, 0.3275911
    %v1346 = vmul.f32 %v1344, 0.3275911
    %v1347 = vadd.f32 %v1345, 1.0
    %v1348 = vadd.f32 %v1346, 1.0
    %v1349 = vrcp.pop %v1347
    %v1350 = vmul.f32 %v1347, %v1349
    %v1351 = vsub.f32 1.0, %v1350
    %v1352 = vmul.f32 %v1349, %v1351
    %v1353 = vadd.f32 %v1349, %v1352
    %vm1354 = vweird.f32 %v1347
    %vm1355 = vweird.f32 %v1349
    %vm1356 = vmor %vm1354, %vm1355
    %v1357 = vsel %vm1356, %v1349, %v1353
    %v1358 = vand.u32 2147483647, %v1347
    %vm1359 = vcmp.eq.f32.partialorder %v1358, 8.507059e+37
    %v1360 = vand.u32 %v1347, 2147483648
    %v1361 = vor.u32 1.1754944e-38, %v1360
    %v1362 = vsel %vm1359, %v1361, %v1357
    %v1363 = vmul.f32 1.0, %v1362
    %v1364 = vrcp.pop %v1348
    %v1365 = vmul.f32 %v1348, %v1364
    %v1366 = vsub.f32 1.0, %v1365
    %v1367 = vmul.f32 %v1364, %v1366
    %v1368 = vadd.f32 %v1364, %v1367
    %vm1369 = vweird.f32 %v1348
    %vm1370 = vweird.f32 %v1364
    %vm1371 = vmor %vm1369, %vm1370
    %v1372 = vsel %vm1371, %v1364, %v1368
    %v1373 = vand.u32 2147483647, %v1348
    %vm1374 = vcmp.eq.f32.partialorder %v1373, 8.507059e+37
    %v1375 = vand.u32 %v1348, 2147483648
    %v1376 = vor.u32 1.1754944e-38, %v1375
    %v1377 = vsel %vm1374, %v1376, %v1372
    %v1378 = vmul.f32 1.0, %v1377
    %v1379 = vmul.f32 %v1363, 1.0614054
    %v1380 = vmul.f32 %v1378, 1.0614054
    %v1381 = vadd.f32 %v1379, -1.4531521
    %v1382 = vadd.f32 %v1380, -1.4531521
    %v1383 = vmul.f32 %v1381, %v1363
    %v1384 = vmul.f32 %v1382, %v1378
    %v1385 = vadd.f32 %v1383, 1.4214138
    %v1386 = vadd.f32 %v1384, 1.4214138
    %v1387 = vmul.f32 %v1385, %v1363
    %v1388 = vmul.f32 %v1386, %v1378
    %v1389 = vadd.f32 %v1387, -0.28449672
    %v1390 = vadd.f32 %v1388, -0.28449672
    %v1391 = vmul.f32 %v1389, %v1363
    %v1392 = vmul.f32 %v1390, %v1378
    %v1393 = vadd.f32 %v1391, 0.2548296
    %v1394 = vadd.f32 %v1392, 0.2548296
    %v1395 = vmul.f32 %v1393, %v1363
    %v1396 = vmul.f32 %v1394, %v1378
    %v1397 = vsub.f32 0.0, %v1343
    %v1398 = vsub.f32 0.0, %v1344
    %v1399 = vmul.f32 %v1397, %v1343
    %v1400 = vmul.f32 %v1398, %v1344
    %v1401 = vmul.f32 %v1399, 1.442695
    %v1402 = vpow.pop %v1401
    %v1403 = vmul.f32 %v1400, 1.442695
    %v1404 = vpow.pop %v1403
    %v1405 = vmul.f32 %v1395, %v1402
    %v1406 = vmul.f32 %v1396, %v1404
    %v1407 = vsub.f32 1.0, %v1405
    %v1408 = vsub.f32 1.0, %v1406
    %vm1409 = vcmp.ge.f32.partialorder %v1341, 0.0
    %vm1410 = vcmp.ge.f32.partialorder %v1342, 0.0
    %v1411 = vsub.f32 0.0, %v1407
    %v1412 = vsub.f32 0.0, %v1408
    %v1413 = vsel %vm1409, %v1407, %v1411
    %v1414 = vsel %vm1410, %v1408, %v1412
    %v1415 = vadd.f32 %v1413, 1.0
    %v1416 = vadd.f32 %v1414, 1.0
    %v1417 = vmul.f32 %v1339, %v1415
    %v1418 = vmul.f32 %v1340, %v1416
    %v1419 = vld [vmem:[#allocation4] sm:$0xff]
    %v1420 = vld [vmem:[#allocation4 + $0x8] sm:$0xff]
    %v1421 = vadd.f32 %v1417, %v1419
    %v1422 = vadd.f32 %v1418, %v1420
    %vm1423 = vcmask 261120
    %1424 = vst.msk [vmem:[#allocation9] sm:$0xff] %vm1423, %v1421
    %1425 = vst.msk [vmem:[#allocation9 + $0x8] sm:$0xff] %vm1423, %v1422
    // Predicated region
    $region22: #{tpu_custom_call.1} parent=1 // pred_check
      _
    $region23: #{tpu_custom_call.1} parent=1 // pred_check_branch
      %1427 = sbr.rel (0) target = $region25
    $region24: #{tpu_custom_call.1} parent=1 // pred_region
      %1429 = vsyncadd [#allocation6], 0
      %s1430 = sshll.u32 [#allocation9], 4
      %s1431 = int_to_ptr.vmem [resolvable:$true] %s1430
      %s1432 = sshll.u32 %s3, 4
      %s1433 = int_to_ptr.hbm [resolvable:$true] %s1432
      %1438 = dma.vmem_to_hbm [thread:$0]  %s1431, 256, %s1433, [#allocation6], 128, 128, 8
    $region25: #{tpu_custom_call.1} parent=1 // pred_fallthru
      _
    // Predicated region
    $region26: #{tpu_custom_call.1} parent=1 // pred_check
      _
    $region27: #{tpu_custom_call.1} parent=1 // pred_check_branch
      %1440 = sbr.rel (0) target = $region29
    $region28: #{tpu_custom_call.1} parent=1 // pred_region
      %1442 = dma.done [#allocation6], 256
    $region29: #{tpu_custom_call.1} parent=1 // pred_fallthru
      _
    %1443 = vsyncpa [#allocation5], 1
    %1444 = vsyncpa [#allocation6], 1
    %1445 = vsyncpa [#allocation7], 1

</llo_original>
